<compile_context>
chip_gen: v6e
topology: v6e:2x2x1
jax: 0.10.0
libtpu: 0.0.40
codegen_flags: <defaults>
</compile_context>

<pallas_src>
import math
import numpy as np
import jax
import jax.numpy as jnp
from jax.experimental import pallas as pl
from jax.experimental.pallas import tpu as pltpu


# ----------------------------- Pallas kernels ------------------------------

def conv_relu_pool_kernel(p_ref, w_ref, b_ref, o_ref):
    """p_ref: (4, TM, K) bf16 im2col patches (axis 0 = 2x2 pool-window position)
       w_ref: (K, 128) bf16 conv weights, cout zero-padded to 128 lanes
       b_ref: (1, 128) f32 bias (zero-padded)
       o_ref: (TM, 128) bf16 = maxpool2x2(relu(conv(x))), lane-dense."""
    tm = o_ref.shape[0]
    # Single MXU matmul over all 4 pool positions (rows stacked, sublane-aligned).
    p = jnp.concatenate([p_ref[0], p_ref[1], p_ref[2], p_ref[3]], axis=0)   # (4*TM, K)
    d = jnp.dot(p, w_ref[...], preferred_element_type=jnp.float32)          # (4*TM, 128) f32
    # 2x2 max-pool over the 4 position blocks, THEN bias + ReLU (equivalent, 1/4 VPU work).
    m = jnp.maximum(jnp.maximum(d[0:tm], d[tm:2 * tm]),
                    jnp.maximum(d[2 * tm:3 * tm], d[3 * tm:4 * tm]))
    y = jnp.maximum(m + b_ref[...], 0.0)                                     # f32 VPU ops
    o_ref[...] = y.astype(o_ref.dtype)


def mlp_kernel(x_ref, w4_ref, b4_ref, w5_ref, b5_ref, w6_ref, b6_ref, o_ref):
    """Fused f4 -> relu -> f5 -> relu -> f6; bf16 matmul operands, f32 accum/VPU."""
    h = jnp.dot(x_ref[...], w4_ref[...], preferred_element_type=jnp.float32) + b4_ref[...]
    h = jnp.maximum(h, 0.0).astype(w5_ref.dtype)
    h = jnp.dot(h, w5_ref[...], preferred_element_type=jnp.float32) + b5_ref[...]
    h = jnp.maximum(h, 0.0).astype(w6_ref.dtype)
    o_ref[...] = jnp.dot(h, w6_ref[...], preferred_element_type=jnp.float32) + b6_ref[...]


# ------------------------------ kernel wrappers ------------------------------

def conv_relu_pool(patches, w_mat, b_row, tile_rows):
    """patches: (4, M, K) bf16;  w_mat: (K, 128) bf16;  b_row: (1, 128) f32.
    Returns (M, 128) bf16, gridded over M in tiles of `tile_rows` rows."""
    _, M, K = patches.shape
    N = w_mat.shape[1]
    assert M % tile_rows == 0 and tile_rows % 8 == 0
    grid = (M // tile_rows,)
    return pl.pallas_call(
        conv_relu_pool_kernel,
        out_shape=jax.ShapeDtypeStruct((M, N), jnp.bfloat16),
        grid=grid,
        in_specs=[
            pl.BlockSpec((4, tile_rows, K), lambda i: (0, i, 0)),
            pl.BlockSpec((K, N), lambda i: (0, 0)),
            pl.BlockSpec((1, N), lambda i: (0, 0)),
        ],
        out_specs=pl.BlockSpec((tile_rows, N), lambda i: (i, 0)),
        compiler_params=pltpu.CompilerParams(dimension_semantics=("parallel",)),
    )(patches, w_mat, b_row)


def mlp(x, w4, b4, w5, b5, w6, b6):
    """x: (B, 256) bf16; weights bf16 (pre-transposed, f6 cout padded to 128);
    biases (1, N) f32.  Returns (B, 128) f32 logits (lane-dense, slice [:, :10])."""
    B, Din = x.shape
    N = w6.shape[1]
    TB = 256 if B % 256 == 0 else B      # batch tile; whole batch for small B
    grid = (B // TB,)
    return pl.pallas_call(
        mlp_kernel,
        out_shape=jax.ShapeDtypeStruct((B, N), jnp.float32),
        grid=grid,
        in_specs=[
            pl.BlockSpec((TB, Din), lambda i: (i, 0)),
            pl.BlockSpec(w4.shape, lambda i: (0, 0)),
            pl.BlockSpec(b4.shape, lambda i: (0, 0)),
            pl.BlockSpec(w5.shape, lambda i: (0, 0)),
            pl.BlockSpec(b5.shape, lambda i: (0, 0)),
            pl.BlockSpec(w6.shape, lambda i: (0, 0)),
            pl.BlockSpec(b6.shape, lambda i: (0, 0)),
        ],
        out_specs=pl.BlockSpec((TB, N), lambda i: (i, 0)),
        compiler_params=pltpu.CompilerParams(dimension_semantics=("parallel",)),
    )(x, w4, b4, w5, b5, w6, b6)


# ------------------------------- JAX glue -----------------------------------

def im2col_pool_patches(x_nhwc, k):
    """x_nhwc: (B, H, W, C) -> (4, B*Hp*Wp, k*k*C) patches for VALID conv with
    kernel k followed by a 2x2/2 max pool.  Feature order is (ki, kj, c)."""
    B, H, W, C = x_nhwc.shape
    Ho, Wo = H - k + 1, W - k + 1
    Hp, Wp = Ho // 2, Wo // 2
    cols = jnp.concatenate(
        [x_nhwc[:, ki:ki + Ho, kj:kj + Wo, :] for ki in range(k) for kj in range(k)],
        axis=-1)                                   # (B, Ho, Wo, k*k*C)
    cols = cols.reshape(B, Hp, 2, Wp, 2, k * k * C)
    cols = cols.transpose(2, 4, 0, 1, 3, 5)        # (pi, pj, B, Hp, Wp, KKC)
    return cols.reshape(4, B * Hp * Wp, k * k * C)


def conv_w_to_mat(w_oihw):
    """(O, I, kh, kw) -> (kh*kw*I, O) matching the (ki, kj, c) patch order."""
    O, I, kh, kw = w_oihw.shape
    return w_oihw.transpose(2, 3, 1, 0).reshape(kh * kw * I, O)


def prepare_params(params):
    """One-time (load-time) weight prep: im2col-matrix form, transpose for the
    MLP, zero-pad cout to 128 lanes, cast matmul operands to bf16."""
    w1, b1, w2, b2, w4, b4, w5, b5, w6, b6 = params

    def pad_cols(a, n):
        return jnp.pad(a, ((0, 0), (0, n - a.shape[1])))

    def pad_bias(b, n):
        return jnp.pad(b, (0, n - b.shape[0])).reshape(1, n).astype(jnp.float32)

    w1m = pad_cols(conv_w_to_mat(w1), 128).astype(jnp.bfloat16)   # (25, 128)
    b1p = pad_bias(b1, 128)                                       # (1, 128) f32
    w2m = pad_cols(conv_w_to_mat(w2), 128).astype(jnp.bfloat16)   # (150, 128)
    b2p = pad_bias(b2, 128)
    w4t = w4.T.astype(jnp.bfloat16)                               # (256, 120)
    b4r = b4.reshape(1, -1).astype(jnp.float32)
    w5t = w5.T.astype(jnp.bfloat16)                               # (120, 84)
    b5r = b5.reshape(1, -1).astype(jnp.float32)
    w6t = pad_cols(w6.T, 128).astype(jnp.bfloat16)                # (84, 128)
    b6p = pad_bias(b6, 128)
    return (w1m, b1p, w2m, b2p, w4t, b4r, w5t, b5r, w6t, b6p)


@jax.jit
def garment_classifier_forward(x_nchw, prepared):
    w1m, b1p, w2m, b2p, w4t, b4r, w5t, b5r, w6t, b6p = prepared
    B = x_nchw.shape[0]
    # Batch elements per conv grid step; keeps VMEM blocks small (v7x 64 MiB OK).
    bt = math.gcd(B, 16)

    # --- c1 (Conv2d 1->6, k=5) + ReLU + s2 (MaxPool 2x2) ---
    x_nhwc = x_nchw.transpose(0, 2, 3, 1)                          # (B, 28, 28, 1)
    p1 = im2col_pool_patches(x_nhwc, 5).astype(jnp.bfloat16)       # (4, B*144, 25)
    y1 = conv_relu_pool(p1, w1m, b1p, tile_rows=bt * 144)          # (B*144, 128) bf16
    y1 = y1[:, :6].reshape(B, 12, 12, 6)                           # NHWC

    # --- c3 (Conv2d 6->16, k=5) + ReLU + s4 (MaxPool 2x2) ---
    p2 = im2col_pool_patches(y1, 5).astype(jnp.bfloat16)           # (4, B*16, 150)
    y2 = conv_relu_pool(p2, w2m, b2p, tile_rows=bt * 16)           # (B*16, 128) bf16
    y2 = y2[:, :16].reshape(B, 4, 4, 16)                           # NHWC

    # --- flatten in PyTorch NCHW order: x.view(-1, 16*4*4) ---
    flat = y2.transpose(0, 3, 1, 2).reshape(B, 16 * 4 * 4)         # (B, 256) bf16

    # --- f4 -> relu -> f5 -> relu -> f6 (fused kernel), slice padded lanes ---
    return mlp(flat, w4t, b4r, w5t, b5r, w6t, b6p)[:, :10]         # (B, 10) f32


# --------------------------- reference (pure JAX) ---------------------------

def reference_forward(x, params, cast_dtype=None):
    """Pure-JAX reference.  With cast_dtype=jnp.bfloat16 it rounds matmul
    operands / stored activations exactly where the kernels do (so the only
    remaining difference is f32 accumulation order)."""
    c = (lambda a: a) if cast_dtype is None else \
        (lambda a: a.astype(cast_dtype).astype(jnp.float32))
    w1, b1, w2, b2, w4, b4, w5, b5, w6, b6 = params
    dn = ('NCHW', 'OIHW', 'NCHW')
    y = jax.lax.conv_general_dilated(c(x), c(w1), (1, 1), 'VALID', dimension_numbers=dn)
    y = jnp.maximum(y + b1[None, :, None, None], 0.0)
    y = jax.lax.reduce_window(y, -jnp.inf, jax.lax.max, (1, 1, 2, 2), (1, 1, 2, 2), 'VALID')
    y = c(y)
    y = jax.lax.conv_general_dilated(y, c(w2), (1, 1), 'VALID', dimension_numbers=dn)
    y = jnp.maximum(y + b2[None, :, None, None], 0.0)
    y = jax.lax.reduce_window(y, -jnp.inf, jax.lax.max, (1, 1, 2, 2), (1, 1, 2, 2), 'VALID')
    y = c(y).reshape(y.shape[0], -1)
    h = jnp.maximum(y @ c(w4).T + b4, 0.0)
    h = c(h)
    h = jnp.maximum(h @ c(w5).T + b5, 0.0)
    h = c(h)
    return h @ c(w6).T + b6


# ---------------------------------- main ------------------------------------

def init_params(key):
    """Deterministic init mimicking PyTorch defaults: U(-1/sqrt(fan_in), +)."""
    def u(k, shape, fan_in):
        bound = 1.0 / np.sqrt(fan_in)
        return jax.random.uniform(k, shape, jnp.float32, -bound, bound)

    ks = jax.random.split(key, 10)
    w1 = u(ks[0], (6, 1, 5, 5), 1 * 5 * 5);   b1 = u(ks[1], (6,), 1 * 5 * 5)
    w2 = u(ks[2], (16, 6, 5, 5), 6 * 5 * 5);  b2 = u(ks[3], (16,), 6 * 5 * 5)
    w4 = u(ks[4], (120, 256), 256);           b4 = u(ks[5], (120,), 256)
    w5 = u(ks[6], (84, 120), 120);            b5 = u(ks[7], (84,), 120)
    w6 = u(ks[8], (10, 84), 84);              b6 = u(ks[9], (10,), 84)
    return (w1, b1, w2, b2, w4, b4, w5, b5, w6, b6)


if __name__ == "__main__":
    key = jax.random.PRNGKey(0)
    k_x, k_p = jax.random.split(key)
    # Forward implies 28x28 single-channel input (Fashion-MNIST); batch=2.
    x = jax.random.normal(k_x, (2, 1, 28, 28), dtype=jnp.float32)
    params = init_params(k_p)
    prepared = prepare_params(params)

    out = jax.block_until_ready(garment_classifier_forward(x, prepared))
    assert out.shape == (2, 10), out.shape

    # Tight structural check vs. a reference that applies the same bf16 operand
    # rounding (only f32 accumulation order differs).
    ref_bf16 = jax.block_until_ready(reference_forward(x, params, cast_dtype=jnp.bfloat16))
    np.testing.assert_allclose(np.asarray(out), np.asarray(ref_bf16), rtol=2e-3, atol=2e-3)

    # Loose sanity check vs. the pure-f32 PyTorch-equivalent reference
    # (tolerance reflects intentional bf16 MXU operands).
    ref_f32 = jax.block_until_ready(reference_forward(x, params))
    np.testing.assert_allclose(np.asarray(out), np.asarray(ref_f32), rtol=5e-2, atol=3e-2)

    print("KERNEL_OK")
</pallas_src>

<mosaic_0001>
module attributes {stable_mosaic.version = 11 : i64} {
  func.func @conv_relu_pool_kernel(%arg0: i32, %arg1: memref<4x288x25xbf16, #tpu.memory_space<vmem>>, %arg2: memref<25x128xbf16, #tpu.memory_space<vmem>>, %arg3: memref<1x128xf32, #tpu.memory_space<vmem>>, %arg4: memref<288x128xbf16, #tpu.memory_space<vmem>>) attributes {dimension_semantics = [#tpu.dimension_semantics<parallel>], iteration_bounds = array<i64: 1>, scalar_prefetch = 0 : i64, scratch_operands = 0 : i64, tpu.core_type = #tpu.core_type<tc>, window_params = [{transform_indices = @transform_0, window_bounds = array<i64: 4, 288, 25>}, {pipeline_mode = #tpu.pipeline_mode<synchronous>, transform_indices = @transform_1, window_bounds = array<i64: 25, 128>}, {pipeline_mode = #tpu.pipeline_mode<synchronous>, transform_indices = @transform_2, window_bounds = array<i64: 1, 128>}, {transform_indices = @transform_3, window_bounds = array<i64: 288, 128>}]} {
    %c0 = arith.constant 0 : index
    %c0_0 = arith.constant 0 : index
    %c0_1 = arith.constant 0 : index
    %0 = vector.load %arg1[%c0, %c0_0, %c0_1] : memref<4x288x25xbf16, #tpu.memory_space<vmem>>, vector<1x288x25xbf16>
    %1 = vector.shape_cast %0 : vector<1x288x25xbf16> to vector<288x25xbf16>
    %c1 = arith.constant 1 : index
    %c0_2 = arith.constant 0 : index
    %c0_3 = arith.constant 0 : index
    %2 = vector.load %arg1[%c1, %c0_2, %c0_3] : memref<4x288x25xbf16, #tpu.memory_space<vmem>>, vector<1x288x25xbf16>
    %3 = vector.shape_cast %2 : vector<1x288x25xbf16> to vector<288x25xbf16>
    %c2 = arith.constant 2 : index
    %c0_4 = arith.constant 0 : index
    %c0_5 = arith.constant 0 : index
    %4 = vector.load %arg1[%c2, %c0_4, %c0_5] : memref<4x288x25xbf16, #tpu.memory_space<vmem>>, vector<1x288x25xbf16>
    %5 = vector.shape_cast %4 : vector<1x288x25xbf16> to vector<288x25xbf16>
    %c3 = arith.constant 3 : index
    %c0_6 = arith.constant 0 : index
    %c0_7 = arith.constant 0 : index
    %6 = vector.load %arg1[%c3, %c0_6, %c0_7] : memref<4x288x25xbf16, #tpu.memory_space<vmem>>, vector<1x288x25xbf16>
    %7 = vector.shape_cast %6 : vector<1x288x25xbf16> to vector<288x25xbf16>
    %8 = tpu.concatenate %1, %3, %5, %7 in 0 : vector<288x25xbf16>, vector<288x25xbf16>, vector<288x25xbf16>, vector<288x25xbf16> -> vector<1152x25xbf16>
    %c0_8 = arith.constant 0 : index
    %c0_9 = arith.constant 0 : index
    %9 = vector.load %arg2[%c0_8, %c0_9] : memref<25x128xbf16, #tpu.memory_space<vmem>>, vector<25x128xbf16>
    %cst = arith.constant dense<0.000000e+00> : vector<1152x128xf32>
    %10 = tpu.matmul %8, %9, %cst {dimension_numbers = #tpu.dot_dimension_numbers<[1], [0], [0], [1], [0, 0, 1, 1], [], []>} : vector<1152x25xbf16>, vector<25x128xbf16>, vector<1152x128xf32> -> vector<1152x128xf32>
    %11 = vector.extract_strided_slice %10 {offsets = [0, 0], sizes = [288, 128], strides = [1, 1]} : vector<1152x128xf32> to vector<288x128xf32>
    %12 = vector.extract_strided_slice %10 {offsets = [288, 0], sizes = [288, 128], strides = [1, 1]} : vector<1152x128xf32> to vector<288x128xf32>
    %13 = arith.maximumf %11, %12 : vector<288x128xf32>
    %14 = vector.extract_strided_slice %10 {offsets = [576, 0], sizes = [288, 128], strides = [1, 1]} : vector<1152x128xf32> to vector<288x128xf32>
    %15 = vector.extract_strided_slice %10 {offsets = [864, 0], sizes = [288, 128], strides = [1, 1]} : vector<1152x128xf32> to vector<288x128xf32>
    %16 = arith.maximumf %14, %15 : vector<288x128xf32>
    %17 = arith.maximumf %13, %16 : vector<288x128xf32>
    %c0_10 = arith.constant 0 : index
    %c0_11 = arith.constant 0 : index
    %18 = vector.load %arg3[%c0_10, %c0_11] : memref<1x128xf32, #tpu.memory_space<vmem>>, vector<1x128xf32>
    %19 = vector.broadcast %18 : vector<1x128xf32> to vector<288x128xf32>
    %20 = arith.addf %17, %19 : vector<288x128xf32>
    %cst_12 = arith.constant 0.000000e+00 : f32
    %21 = vector.broadcast %cst_12 : f32 to vector<288x128xf32>
    %22 = arith.maximumf %20, %21 : vector<288x128xf32>
    %23 = arith.truncf %22 : vector<288x128xf32> to vector<288x128xbf16>
    %c0_13 = arith.constant 0 : index
    %c0_14 = arith.constant 0 : index
    %24 = vector.load %arg4[%c0_13, %c0_14] : memref<288x128xbf16, #tpu.memory_space<vmem>>, vector<288x128xbf16>
    tpu.vector_store %arg4[%c0_13, %c0_14], %23 {strides = array<i32>} : memref<288x128xbf16, #tpu.memory_space<vmem>>, vector<288x128xbf16>,
    return
  }
  func.func @transform_0(%arg0: i32) -> (i32, i32, i32) {
    %c0_i32 = arith.constant 0 : i32
    %c0_i32_0 = arith.constant 0 : i32
    %c0_i32_1 = arith.constant 0 : i32
    return %c0_i32, %arg0, %c0_i32_0 : i32, i32, i32
  }
  func.func @transform_1(%arg0: i32) -> (i32, i32) {
    %c0_i32 = arith.constant 0 : i32
    %c0_i32_0 = arith.constant 0 : i32
    %c0_i32_1 = arith.constant 0 : i32
    return %c0_i32, %c0_i32_0 : i32, i32
  }
  func.func @transform_2(%arg0: i32) -> (i32, i32) {
    %c0_i32 = arith.constant 0 : i32
    %c0_i32_0 = arith.constant 0 : i32
    %c0_i32_1 = arith.constant 0 : i32
    return %c0_i32, %c0_i32_0 : i32, i32
  }
  func.func @transform_3(%arg0: i32) -> (i32, i32) {
    %c0_i32 = arith.constant 0 : i32
    %c0_i32_0 = arith.constant 0 : i32
    return %arg0, %c0_i32 : i32, i32
  }
}

module attributes {stable_mosaic.version = 11 : i64} {
  func.func @conv_relu_pool_kernel(%arg0: i32, %arg1: memref<4x32x150xbf16, #tpu.memory_space<vmem>>, %arg2: memref<150x128xbf16, #tpu.memory_space<vmem>>, %arg3: memref<1x128xf32, #tpu.memory_space<vmem>>, %arg4: memref<32x128xbf16, #tpu.memory_space<vmem>>) attributes {dimension_semantics = [#tpu.dimension_semantics<parallel>], iteration_bounds = array<i64: 1>, scalar_prefetch = 0 : i64, scratch_operands = 0 : i64, tpu.core_type = #tpu.core_type<tc>, window_params = [{transform_indices = @transform_0, window_bounds = array<i64: 4, 32, 150>}, {pipeline_mode = #tpu.pipeline_mode<synchronous>, transform_indices = @transform_1, window_bounds = array<i64: 150, 128>}, {pipeline_mode = #tpu.pipeline_mode<synchronous>, transform_indices = @transform_2, window_bounds = array<i64: 1, 128>}, {transform_indices = @transform_3, window_bounds = array<i64: 32, 128>}]} {
    %c0 = arith.constant 0 : index
    %c0_0 = arith.constant 0 : index
    %c0_1 = arith.constant 0 : index
    %0 = vector.load %arg1[%c0, %c0_0, %c0_1] : memref<4x32x150xbf16, #tpu.memory_space<vmem>>, vector<1x32x150xbf16>
    %1 = vector.shape_cast %0 : vector<1x32x150xbf16> to vector<32x150xbf16>
    %c1 = arith.constant 1 : index
    %c0_2 = arith.constant 0 : index
    %c0_3 = arith.constant 0 : index
    %2 = vector.load %arg1[%c1, %c0_2, %c0_3] : memref<4x32x150xbf16, #tpu.memory_space<vmem>>, vector<1x32x150xbf16>
    %3 = vector.shape_cast %2 : vector<1x32x150xbf16> to vector<32x150xbf16>
    %c2 = arith.constant 2 : index
    %c0_4 = arith.constant 0 : index
    %c0_5 = arith.constant 0 : index
    %4 = vector.load %arg1[%c2, %c0_4, %c0_5] : memref<4x32x150xbf16, #tpu.memory_space<vmem>>, vector<1x32x150xbf16>
    %5 = vector.shape_cast %4 : vector<1x32x150xbf16> to vector<32x150xbf16>
    %c3 = arith.constant 3 : index
    %c0_6 = arith.constant 0 : index
    %c0_7 = arith.constant 0 : index
    %6 = vector.load %arg1[%c3, %c0_6, %c0_7] : memref<4x32x150xbf16, #tpu.memory_space<vmem>>, vector<1x32x150xbf16>
    %7 = vector.shape_cast %6 : vector<1x32x150xbf16> to vector<32x150xbf16>
    %8 = tpu.concatenate %1, %3, %5, %7 in 0 : vector<32x150xbf16>, vector<32x150xbf16>, vector<32x150xbf16>, vector<32x150xbf16> -> vector<128x150xbf16>
    %c0_8 = arith.constant 0 : index
    %c0_9 = arith.constant 0 : index
    %9 = vector.load %arg2[%c0_8, %c0_9] : memref<150x128xbf16, #tpu.memory_space<vmem>>, vector<150x128xbf16>
    %cst = arith.constant dense<0.000000e+00> : vector<128x128xf32>
    %10 = tpu.matmul %8, %9, %cst {dimension_numbers = #tpu.dot_dimension_numbers<[1], [0], [0], [1], [0, 0, 1, 1], [], []>} : vector<128x150xbf16>, vector<150x128xbf16>, vector<128x128xf32> -> vector<128x128xf32>
    %11 = vector.extract_strided_slice %10 {offsets = [0, 0], sizes = [32, 128], strides = [1, 1]} : vector<128x128xf32> to vector<32x128xf32>
    %12 = vector.extract_strided_slice %10 {offsets = [32, 0], sizes = [32, 128], strides = [1, 1]} : vector<128x128xf32> to vector<32x128xf32>
    %13 = arith.maximumf %11, %12 : vector<32x128xf32>
    %14 = vector.extract_strided_slice %10 {offsets = [64, 0], sizes = [32, 128], strides = [1, 1]} : vector<128x128xf32> to vector<32x128xf32>
    %15 = vector.extract_strided_slice %10 {offsets = [96, 0], sizes = [32, 128], strides = [1, 1]} : vector<128x128xf32> to vector<32x128xf32>
    %16 = arith.maximumf %14, %15 : vector<32x128xf32>
    %17 = arith.maximumf %13, %16 : vector<32x128xf32>
    %c0_10 = arith.constant 0 : index
    %c0_11 = arith.constant 0 : index
    %18 = vector.load %arg3[%c0_10, %c0_11] : memref<1x128xf32, #tpu.memory_space<vmem>>, vector<1x128xf32>
    %19 = vector.broadcast %18 : vector<1x128xf32> to vector<32x128xf32>
    %20 = arith.addf %17, %19 : vector<32x128xf32>
    %cst_12 = arith.constant 0.000000e+00 : f32
    %21 = vector.broadcast %cst_12 : f32 to vector<32x128xf32>
    %22 = arith.maximumf %20, %21 : vector<32x128xf32>
    %23 = arith.truncf %22 : vector<32x128xf32> to vector<32x128xbf16>
    %c0_13 = arith.constant 0 : index
    %c0_14 = arith.constant 0 : index
    %24 = vector.load %arg4[%c0_13, %c0_14] : memref<32x128xbf16, #tpu.memory_space<vmem>>, vector<32x128xbf16>
    tpu.vector_store %arg4[%c0_13, %c0_14], %23 {strides = array<i32>} : memref<32x128xbf16, #tpu.memory_space<vmem>>, vector<32x128xbf16>,
    return
  }
  func.func @transform_0(%arg0: i32) -> (i32, i32, i32) {
    %c0_i32 = arith.constant 0 : i32
    %c0_i32_0 = arith.constant 0 : i32
    %c0_i32_1 = arith.constant 0 : i32
    return %c0_i32, %arg0, %c0_i32_0 : i32, i32, i32
  }
  func.func @transform_1(%arg0: i32) -> (i32, i32) {
    %c0_i32 = arith.constant 0 : i32
    %c0_i32_0 = arith.constant 0 : i32
    %c0_i32_1 = arith.constant 0 : i32
    return %c0_i32, %c0_i32_0 : i32, i32
  }
  func.func @transform_2(%arg0: i32) -> (i32, i32) {
    %c0_i32 = arith.constant 0 : i32
    %c0_i32_0 = arith.constant 0 : i32
    %c0_i32_1 = arith.constant 0 : i32
    return %c0_i32, %c0_i32_0 : i32, i32
  }
  func.func @transform_3(%arg0: i32) -> (i32, i32) {
    %c0_i32 = arith.constant 0 : i32
    %c0_i32_0 = arith.constant 0 : i32
    return %arg0, %c0_i32 : i32, i32
  }
}

module attributes {stable_mosaic.version = 11 : i64} {
  func.func @mlp_kernel(%arg0: i32, %arg1: memref<2x256xbf16, #tpu.memory_space<vmem>>, %arg2: memref<256x120xbf16, #tpu.memory_space<vmem>>, %arg3: memref<1x120xf32, #tpu.memory_space<vmem>>, %arg4: memref<120x84xbf16, #tpu.memory_space<vmem>>, %arg5: memref<1x84xf32, #tpu.memory_space<vmem>>, %arg6: memref<84x128xbf16, #tpu.memory_space<vmem>>, %arg7: memref<1x128xf32, #tpu.memory_space<vmem>>, %arg8: memref<2x128xf32, #tpu.memory_space<vmem>>) attributes {dimension_semantics = [#tpu.dimension_semantics<parallel>], iteration_bounds = array<i64: 1>, scalar_prefetch = 0 : i64, scratch_operands = 0 : i64, tpu.core_type = #tpu.core_type<tc>, window_params = [{transform_indices = @transform_0, window_bounds = array<i64: 2, 256>}, {pipeline_mode = #tpu.pipeline_mode<synchronous>, transform_indices = @transform_1, window_bounds = array<i64: 256, 120>}, {pipeline_mode = #tpu.pipeline_mode<synchronous>, transform_indices = @transform_2, window_bounds = array<i64: 1, 120>}, {pipeline_mode = #tpu.pipeline_mode<synchronous>, transform_indices = @transform_3, window_bounds = array<i64: 120, 84>}, {pipeline_mode = #tpu.pipeline_mode<synchronous>, transform_indices = @transform_4, window_bounds = array<i64: 1, 84>}, {pipeline_mode = #tpu.pipeline_mode<synchronous>, transform_indices = @transform_5, window_bounds = array<i64: 84, 128>}, {pipeline_mode = #tpu.pipeline_mode<synchronous>, transform_indices = @transform_6, window_bounds = array<i64: 1, 128>}, {transform_indices = @transform_7, window_bounds = array<i64: 2, 128>}]} {
    %c0 = arith.constant 0 : index
    %c0_0 = arith.constant 0 : index
    %0 = vector.load %arg1[%c0, %c0_0] : memref<2x256xbf16, #tpu.memory_space<vmem>>, vector<2x256xbf16>
    %c0_1 = arith.constant 0 : index
    %c0_2 = arith.constant 0 : index
    %1 = vector.load %arg2[%c0_1, %c0_2] : memref<256x120xbf16, #tpu.memory_space<vmem>>, vector<256x120xbf16>
    %cst = arith.constant dense<0.000000e+00> : vector<2x120xf32>
    %2 = tpu.matmul %0, %1, %cst {dimension_numbers = #tpu.dot_dimension_numbers<[1], [0], [0], [1], [0, 0, 1, 1], [], []>} : vector<2x256xbf16>, vector<256x120xbf16>, vector<2x120xf32> -> vector<2x120xf32>
    %c0_3 = arith.constant 0 : index
    %c0_4 = arith.constant 0 : index
    %3 = vector.load %arg3[%c0_3, %c0_4] : memref<1x120xf32, #tpu.memory_space<vmem>>, vector<1x120xf32>
    %4 = vector.broadcast %3 : vector<1x120xf32> to vector<2x120xf32>
    %5 = arith.addf %2, %4 : vector<2x120xf32>
    %cst_5 = arith.constant 0.000000e+00 : f32
    %6 = vector.broadcast %cst_5 : f32 to vector<2x120xf32>
    %7 = arith.maximumf %5, %6 : vector<2x120xf32>
    %8 = arith.truncf %7 : vector<2x120xf32> to vector<2x120xbf16>
    %c0_6 = arith.constant 0 : index
    %c0_7 = arith.constant 0 : index
    %9 = vector.load %arg4[%c0_6, %c0_7] : memref<120x84xbf16, #tpu.memory_space<vmem>>, vector<120x84xbf16>
    %cst_8 = arith.constant dense<0.000000e+00> : vector<2x84xf32>
    %10 = tpu.matmul %8, %9, %cst_8 {dimension_numbers = #tpu.dot_dimension_numbers<[1], [0], [0], [1], [0, 0, 1, 1], [], []>} : vector<2x120xbf16>, vector<120x84xbf16>, vector<2x84xf32> -> vector<2x84xf32>
    %c0_9 = arith.constant 0 : index
    %c0_10 = arith.constant 0 : index
    %11 = vector.load %arg5[%c0_9, %c0_10] : memref<1x84xf32, #tpu.memory_space<vmem>>, vector<1x84xf32>
    %12 = vector.broadcast %11 : vector<1x84xf32> to vector<2x84xf32>
    %13 = arith.addf %10, %12 : vector<2x84xf32>
    %cst_11 = arith.constant 0.000000e+00 : f32
    %14 = vector.broadcast %cst_11 : f32 to vector<2x84xf32>
    %15 = arith.maximumf %13, %14 : vector<2x84xf32>
    %16 = arith.truncf %15 : vector<2x84xf32> to vector<2x84xbf16>
    %c0_12 = arith.constant 0 : index
    %c0_13 = arith.constant 0 : index
    %17 = vector.load %arg6[%c0_12, %c0_13] : memref<84x128xbf16, #tpu.memory_space<vmem>>, vector<84x128xbf16>
    %cst_14 = arith.constant dense<0.000000e+00> : vector<2x128xf32>
    %18 = tpu.matmul %16, %17, %cst_14 {dimension_numbers = #tpu.dot_dimension_numbers<[1], [0], [0], [1], [0, 0, 1, 1], [], []>} : vector<2x84xbf16>, vector<84x128xbf16>, vector<2x128xf32> -> vector<2x128xf32>
    %c0_15 = arith.constant 0 : index
    %c0_16 = arith.constant 0 : index
    %19 = vector.load %arg7[%c0_15, %c0_16] : memref<1x128xf32, #tpu.memory_space<vmem>>, vector<1x128xf32>
    %20 = vector.broadcast %19 : vector<1x128xf32> to vector<2x128xf32>
    %21 = arith.addf %18, %20 : vector<2x128xf32>
    %c0_17 = arith.constant 0 : index
    %c0_18 = arith.constant 0 : index
    %22 = vector.load %arg8[%c0_17, %c0_18] : memref<2x128xf32, #tpu.memory_space<vmem>>, vector<2x128xf32>
    tpu.vector_store %arg8[%c0_17, %c0_18], %21 {strides = array<i32>} : memref<2x128xf32, #tpu.memory_space<vmem>>, vector<2x128xf32>,
    return
  }
  func.func @transform_0(%arg0: i32) -> (i32, i32) {
    %c0_i32 = arith.constant 0 : i32
    %c0_i32_0 = arith.constant 0 : i32
    return %arg0, %c0_i32 : i32, i32
  }
  func.func @transform_1(%arg0: i32) -> (i32, i32) {
    %c0_i32 = arith.constant 0 : i32
    %c0_i32_0 = arith.constant 0 : i32
    %c0_i32_1 = arith.constant 0 : i32
    return %c0_i32, %c0_i32_0 : i32, i32
  }
  func.func @transform_2(%arg0: i32) -> (i32, i32) {
    %c0_i32 = arith.constant 0 : i32
    %c0_i32_0 = arith.constant 0 : i32
    %c0_i32_1 = arith.constant 0 : i32
    return %c0_i32, %c0_i32_0 : i32, i32
  }
  func.func @transform_3(%arg0: i32) -> (i32, i32) {
    %c0_i32 = arith.constant 0 : i32
    %c0_i32_0 = arith.constant 0 : i32
    %c0_i32_1 = arith.constant 0 : i32
    return %c0_i32, %c0_i32_0 : i32, i32
  }
  func.func @transform_4(%arg0: i32) -> (i32, i32) {
    %c0_i32 = arith.constant 0 : i32
    %c0_i32_0 = arith.constant 0 : i32
    %c0_i32_1 = arith.constant 0 : i32
    return %c0_i32, %c0_i32_0 : i32, i32
  }
  func.func @transform_5(%arg0: i32) -> (i32, i32) {
    %c0_i32 = arith.constant 0 : i32
    %c0_i32_0 = arith.constant 0 : i32
    %c0_i32_1 = arith.constant 0 : i32
    return %c0_i32, %c0_i32_0 : i32, i32
  }
  func.func @transform_6(%arg0: i32) -> (i32, i32) {
    %c0_i32 = arith.constant 0 : i32
    %c0_i32_0 = arith.constant 0 : i32
    %c0_i32_1 = arith.constant 0 : i32
    return %c0_i32, %c0_i32_0 : i32, i32
  }
  func.func @transform_7(%arg0: i32) -> (i32, i32) {
    %c0_i32 = arith.constant 0 : i32
    %c0_i32_0 = arith.constant 0 : i32
    return %arg0, %c0_i32 : i32, i32
  }
}

</mosaic_0001>

<llo_original>
// kernel: garment_classifier_forward.3
$region0: #{garment_classifier_forward.3}
  #allocation0 [shape = 'u32[]', space=smem, size = 0x4, offset = 0x4, fixed_abs, tag = 'smem constant byte address 0x4 - core index']
  #allocation1 [shape = 'u32[144,128]{1,0:T(1,128)}', space=vmem, size = 0x12000, scoped, tag = 'internal scratch']
  %s0 = inlined_call_operand.vmem [shape: bf16[4,288,25], index: 0, kind: input, shape index: {}]
  %s1 = inlined_call_operand.vmem [shape: bf16[25,128], index: 1, kind: input, shape index: {}]
  %s2 = inlined_call_operand.vmem [shape: f32[1,128], index: 2, kind: input, shape index: {}]
  %s3 = inlined_call_operand.vmem [shape: bf16[288,128], index: 3, kind: output, shape index: {}]
  %s4 = sld [smem:[#allocation0]]
  $region22: #{garment_classifier_forward.3} parent=0
    _
  %s6 = ssub.s32 1, %s4
  %s7 = scalar_select 0, %s6, %s4
  // Predicated region
  $region2: #{garment_classifier_forward.3} parent=0 // pred_check
    _
  $region3: #{garment_classifier_forward.3} parent=0 // pred_check_branch
    %9 = sbr.rel (0) target = $region5
  $region4: #{garment_classifier_forward.3} parent=0 // pred_region
    _
  $region5: #{garment_classifier_forward.3} parent=0 // pred_fallthru
    _
  // Predicated region
  $region6: #{garment_classifier_forward.3} parent=0 // pred_check
    _
  $region7: #{garment_classifier_forward.3} parent=0 // pred_check_branch
    %11 = sbr.rel (0) target = $region9
  $region8: #{garment_classifier_forward.3} parent=0 // pred_region
    _
  $region9: #{garment_classifier_forward.3} parent=0 // pred_fallthru
    _
  // Predicated region
  $region10: #{garment_classifier_forward.3} parent=0 // pred_check
    _
  $region11: #{garment_classifier_forward.3} parent=0 // pred_check_branch
    %13 = sbr.rel (0) target = $region13
  $region12: #{garment_classifier_forward.3} parent=0 // pred_region
    _
  $region13: #{garment_classifier_forward.3} parent=0 // pred_fallthru
    _
  %v15 = vld [vmem:[%s0] sm:$0xf]
  %v16 = vld [vmem:[%s0 + $0x4] sm:$0xf]
  %v17 = vld [vmem:[%s0 + $0x8] sm:$0xf]
  %v18 = vld [vmem:[%s0 + $0xc] sm:$0xf]
  %v19 = vld [vmem:[%s0 + $0x10] sm:$0xf]
  %v20 = vld [vmem:[%s0 + $0x14] sm:$0xf]
  %v21 = vld [vmem:[%s0 + $0x18] sm:$0xf]
  %v22 = vld [vmem:[%s0 + $0x1c] sm:$0xf]
  %v23 = vld [vmem:[%s0 + $0x20] sm:$0xf]
  %v24 = vld [vmem:[%s0 + $0x24] sm:$0xf]
  %v25 = vld [vmem:[%s0 + $0x28] sm:$0xf]
  %v26 = vld [vmem:[%s0 + $0x2c] sm:$0xf]
  %v27 = vld [vmem:[%s0 + $0x30] sm:$0xf]
  %v28 = vld [vmem:[%s0 + $0x34] sm:$0xf]
  %v29 = vld [vmem:[%s0 + $0x38] sm:$0xf]
  %v30 = vld [vmem:[%s0 + $0x3c] sm:$0xf]
  %v31 = vld [vmem:[%s0 + $0x40] sm:$0xf]
  %v32 = vld [vmem:[%s0 + $0x44] sm:$0xf]
  %v33 = vld [vmem:[%s0 + $0x48] sm:$0xf]
  %v34 = vld [vmem:[%s0 + $0x4c] sm:$0xf]
  %v35 = vld [vmem:[%s0 + $0x50] sm:$0xf]
  %v36 = vld [vmem:[%s0 + $0x54] sm:$0xf]
  %v37 = vld [vmem:[%s0 + $0x58] sm:$0xf]
  %v38 = vld [vmem:[%s0 + $0x5c] sm:$0xf]
  %v39 = vld [vmem:[%s0 + $0x60] sm:$0xf]
  %v40 = vld [vmem:[%s0 + $0x64] sm:$0xf]
  %v41 = vld [vmem:[%s0 + $0x68] sm:$0xf]
  %v42 = vld [vmem:[%s0 + $0x6c] sm:$0xf]
  %v43 = vld [vmem:[%s0 + $0x70] sm:$0xf]
  %v44 = vld [vmem:[%s0 + $0x74] sm:$0xf]
  %v45 = vld [vmem:[%s0 + $0x78] sm:$0xf]
  %v46 = vld [vmem:[%s0 + $0x7c] sm:$0xf]
  %v47 = vld [vmem:[%s0 + $0x80] sm:$0xf]
  %v48 = vld [vmem:[%s0 + $0x84] sm:$0xf]
  %v49 = vld [vmem:[%s0 + $0x88] sm:$0xf]
  %v50 = vld [vmem:[%s0 + $0x8c] sm:$0xf]
  %s51 = scalar_lea.vmem %s0, 144
  %v52 = vld [vmem:[%s51] sm:$0xf]
  %v53 = vld [vmem:[%s51 + $0x4] sm:$0xf]
  %v54 = vld [vmem:[%s51 + $0x8] sm:$0xf]
  %v55 = vld [vmem:[%s51 + $0xc] sm:$0xf]
  %v56 = vld [vmem:[%s51 + $0x10] sm:$0xf]
  %v57 = vld [vmem:[%s51 + $0x14] sm:$0xf]
  %v58 = vld [vmem:[%s51 + $0x18] sm:$0xf]
  %v59 = vld [vmem:[%s51 + $0x1c] sm:$0xf]
  %v60 = vld [vmem:[%s51 + $0x20] sm:$0xf]
  %v61 = vld [vmem:[%s51 + $0x24] sm:$0xf]
  %v62 = vld [vmem:[%s51 + $0x28] sm:$0xf]
  %v63 = vld [vmem:[%s51 + $0x2c] sm:$0xf]
  %v64 = vld [vmem:[%s51 + $0x30] sm:$0xf]
  %v65 = vld [vmem:[%s51 + $0x34] sm:$0xf]
  %v66 = vld [vmem:[%s51 + $0x38] sm:$0xf]
  %v67 = vld [vmem:[%s51 + $0x3c] sm:$0xf]
  %v68 = vld [vmem:[%s51 + $0x40] sm:$0xf]
  %v69 = vld [vmem:[%s51 + $0x44] sm:$0xf]
  %v70 = vld [vmem:[%s51 + $0x48] sm:$0xf]
  %v71 = vld [vmem:[%s51 + $0x4c] sm:$0xf]
  %v72 = vld [vmem:[%s51 + $0x50] sm:$0xf]
  %v73 = vld [vmem:[%s51 + $0x54] sm:$0xf]
  %v74 = vld [vmem:[%s51 + $0x58] sm:$0xf]
  %v75 = vld [vmem:[%s51 + $0x5c] sm:$0xf]
  %v76 = vld [vmem:[%s51 + $0x60] sm:$0xf]
  %v77 = vld [vmem:[%s51 + $0x64] sm:$0xf]
  %v78 = vld [vmem:[%s51 + $0x68] sm:$0xf]
  %v79 = vld [vmem:[%s51 + $0x6c] sm:$0xf]
  %v80 = vld [vmem:[%s51 + $0x70] sm:$0xf]
  %v81 = vld [vmem:[%s51 + $0x74] sm:$0xf]
  %v82 = vld [vmem:[%s51 + $0x78] sm:$0xf]
  %v83 = vld [vmem:[%s51 + $0x7c] sm:$0xf]
  %v84 = vld [vmem:[%s51 + $0x80] sm:$0xf]
  %v85 = vld [vmem:[%s51 + $0x84] sm:$0xf]
  %v86 = vld [vmem:[%s51 + $0x88] sm:$0xf]
  %v87 = vld [vmem:[%s51 + $0x8c] sm:$0xf]
  %s88 = scalar_lea.vmem %s0, 288
  %v89 = vld [vmem:[%s88] sm:$0xf]
  %v90 = vld [vmem:[%s88 + $0x4] sm:$0xf]
  %v91 = vld [vmem:[%s88 + $0x8] sm:$0xf]
  %v92 = vld [vmem:[%s88 + $0xc] sm:$0xf]
  %v93 = vld [vmem:[%s88 + $0x10] sm:$0xf]
  %v94 = vld [vmem:[%s88 + $0x14] sm:$0xf]
  %v95 = vld [vmem:[%s88 + $0x18] sm:$0xf]
  %v96 = vld [vmem:[%s88 + $0x1c] sm:$0xf]
  %v97 = vld [vmem:[%s88 + $0x20] sm:$0xf]
  %v98 = vld [vmem:[%s88 + $0x24] sm:$0xf]
  %v99 = vld [vmem:[%s88 + $0x28] sm:$0xf]
  %v100 = vld [vmem:[%s88 + $0x2c] sm:$0xf]
  %v101 = vld [vmem:[%s88 + $0x30] sm:$0xf]
  %v102 = vld [vmem:[%s88 + $0x34] sm:$0xf]
  %v103 = vld [vmem:[%s88 + $0x38] sm:$0xf]
  %v104 = vld [vmem:[%s88 + $0x3c] sm:$0xf]
  %v105 = vld [vmem:[%s88 + $0x40] sm:$0xf]
  %v106 = vld [vmem:[%s88 + $0x44] sm:$0xf]
  %v107 = vld [vmem:[%s88 + $0x48] sm:$0xf]
  %v108 = vld [vmem:[%s88 + $0x4c] sm:$0xf]
  %v109 = vld [vmem:[%s88 + $0x50] sm:$0xf]
  %v110 = vld [vmem:[%s88 + $0x54] sm:$0xf]
  %v111 = vld [vmem:[%s88 + $0x58] sm:$0xf]
  %v112 = vld [vmem:[%s88 + $0x5c] sm:$0xf]
  %v113 = vld [vmem:[%s88 + $0x60] sm:$0xf]
  %v114 = vld [vmem:[%s88 + $0x64] sm:$0xf]
  %v115 = vld [vmem:[%s88 + $0x68] sm:$0xf]
  %v116 = vld [vmem:[%s88 + $0x6c] sm:$0xf]
  %v117 = vld [vmem:[%s88 + $0x70] sm:$0xf]
  %v118 = vld [vmem:[%s88 + $0x74] sm:$0xf]
  %v119 = vld [vmem:[%s88 + $0x78] sm:$0xf]
  %v120 = vld [vmem:[%s88 + $0x7c] sm:$0xf]
  %v121 = vld [vmem:[%s88 + $0x80] sm:$0xf]
  %v122 = vld [vmem:[%s88 + $0x84] sm:$0xf]
  %v123 = vld [vmem:[%s88 + $0x88] sm:$0xf]
  %v124 = vld [vmem:[%s88 + $0x8c] sm:$0xf]
  %s125 = scalar_lea.vmem %s0, 432
  %v126 = vld [vmem:[%s125] sm:$0xf]
  %v127 = vld [vmem:[%s125 + $0x4] sm:$0xf]
  %v128 = vld [vmem:[%s125 + $0x8] sm:$0xf]
  %v129 = vld [vmem:[%s125 + $0xc] sm:$0xf]
  %v130 = vld [vmem:[%s125 + $0x10] sm:$0xf]
  %v131 = vld [vmem:[%s125 + $0x14] sm:$0xf]
  %v132 = vld [vmem:[%s125 + $0x18] sm:$0xf]
  %v133 = vld [vmem:[%s125 + $0x1c] sm:$0xf]
  %v134 = vld [vmem:[%s125 + $0x20] sm:$0xf]
  %v135 = vld [vmem:[%s125 + $0x24] sm:$0xf]
  %v136 = vld [vmem:[%s125 + $0x28] sm:$0xf]
  %v137 = vld [vmem:[%s125 + $0x2c] sm:$0xf]
  %v138 = vld [vmem:[%s125 + $0x30] sm:$0xf]
  %v139 = vld [vmem:[%s125 + $0x34] sm:$0xf]
  %v140 = vld [vmem:[%s125 + $0x38] sm:$0xf]
  %v141 = vld [vmem:[%s125 + $0x3c] sm:$0xf]
  %v142 = vld [vmem:[%s125 + $0x40] sm:$0xf]
  %v143 = vld [vmem:[%s125 + $0x44] sm:$0xf]
  %v144 = vld [vmem:[%s125 + $0x48] sm:$0xf]
  %v145 = vld [vmem:[%s125 + $0x4c] sm:$0xf]
  %v146 = vld [vmem:[%s125 + $0x50] sm:$0xf]
  %v147 = vld [vmem:[%s125 + $0x54] sm:$0xf]
  %v148 = vld [vmem:[%s125 + $0x58] sm:$0xf]
  %v149 = vld [vmem:[%s125 + $0x5c] sm:$0xf]
  %v150 = vld [vmem:[%s125 + $0x60] sm:$0xf]
  %v151 = vld [vmem:[%s125 + $0x64] sm:$0xf]
  %v152 = vld [vmem:[%s125 + $0x68] sm:$0xf]
  %v153 = vld [vmem:[%s125 + $0x6c] sm:$0xf]
  %v154 = vld [vmem:[%s125 + $0x70] sm:$0xf]
  %v155 = vld [vmem:[%s125 + $0x74] sm:$0xf]
  %v156 = vld [vmem:[%s125 + $0x78] sm:$0xf]
  %v157 = vld [vmem:[%s125 + $0x7c] sm:$0xf]
  %v158 = vld [vmem:[%s125 + $0x80] sm:$0xf]
  %v159 = vld [vmem:[%s125 + $0x84] sm:$0xf]
  %v160 = vld [vmem:[%s125 + $0x88] sm:$0xf]
  %v161 = vld [vmem:[%s125 + $0x8c] sm:$0xf]
  %v198 = vunpack.c.l.b16 %v15
  %v199 = vunpack.c.l.b16 %v16
  %v200 = vunpack.c.l.b16 %v17
  %v201 = vunpack.c.l.b16 %v18
  %v202 = vunpack.c.l.b16 %v19
  %v203 = vunpack.c.l.b16 %v20
  %v204 = vunpack.c.l.b16 %v21
  %v205 = vunpack.c.l.b16 %v22
  %v206 = vunpack.c.l.b16 %v23
  %v207 = vunpack.c.l.b16 %v24
  %v208 = vunpack.c.l.b16 %v25
  %v209 = vunpack.c.l.b16 %v26
  %v210 = vunpack.c.l.b16 %v27
  %v211 = vunpack.c.l.b16 %v28
  %v212 = vunpack.c.l.b16 %v29
  %v213 = vunpack.c.l.b16 %v30
  %v214 = vunpack.c.l.b16 %v31
  %v215 = vunpack.c.l.b16 %v32
  %v216 = vunpack.c.l.b16 %v33
  %v217 = vunpack.c.l.b16 %v34
  %v218 = vunpack.c.l.b16 %v35
  %v219 = vunpack.c.l.b16 %v36
  %v220 = vunpack.c.l.b16 %v37
  %v221 = vunpack.c.l.b16 %v38
  %v222 = vunpack.c.l.b16 %v39
  %v223 = vunpack.c.l.b16 %v40
  %v224 = vunpack.c.l.b16 %v41
  %v225 = vunpack.c.l.b16 %v42
  %v226 = vunpack.c.l.b16 %v43
  %v227 = vunpack.c.l.b16 %v44
  %v228 = vunpack.c.l.b16 %v45
  %v229 = vunpack.c.l.b16 %v46
  %v230 = vunpack.c.l.b16 %v47
  %v231 = vunpack.c.l.b16 %v48
  %v232 = vunpack.c.l.b16 %v49
  %v233 = vunpack.c.l.b16 %v50
  %v234 = vpack.c.b16 %v199, %v198
  %v235 = vpack.c.b16 %v201, %v200
  %v236 = vpack.c.b16 %v203, %v202
  %v237 = vpack.c.b16 %v205, %v204
  %v238 = vpack.c.b16 %v207, %v206
  %v239 = vpack.c.b16 %v209, %v208
  %v240 = vpack.c.b16 %v211, %v210
  %v241 = vpack.c.b16 %v213, %v212
  %v242 = vpack.c.b16 %v215, %v214
  %v243 = vpack.c.b16 %v217, %v216
  %v244 = vpack.c.b16 %v219, %v218
  %v245 = vpack.c.b16 %v221, %v220
  %v246 = vpack.c.b16 %v223, %v222
  %v247 = vpack.c.b16 %v225, %v224
  %v248 = vpack.c.b16 %v227, %v226
  %v249 = vpack.c.b16 %v229, %v228
  %v250 = vpack.c.b16 %v231, %v230
  %v251 = vpack.c.b16 %v233, %v232
  %v288 = vunpack.c.l.b16 %v52
  %v289 = vunpack.c.l.b16 %v53
  %v290 = vunpack.c.l.b16 %v54
  %v291 = vunpack.c.l.b16 %v55
  %v292 = vunpack.c.l.b16 %v56
  %v293 = vunpack.c.l.b16 %v57
  %v294 = vunpack.c.l.b16 %v58
  %v295 = vunpack.c.l.b16 %v59
  %v296 = vunpack.c.l.b16 %v60
  %v297 = vunpack.c.l.b16 %v61
  %v298 = vunpack.c.l.b16 %v62
  %v299 = vunpack.c.l.b16 %v63
  %v300 = vunpack.c.l.b16 %v64
  %v301 = vunpack.c.l.b16 %v65
  %v302 = vunpack.c.l.b16 %v66
  %v303 = vunpack.c.l.b16 %v67
  %v304 = vunpack.c.l.b16 %v68
  %v305 = vunpack.c.l.b16 %v69
  %v306 = vunpack.c.l.b16 %v70
  %v307 = vunpack.c.l.b16 %v71
  %v308 = vunpack.c.l.b16 %v72
  %v309 = vunpack.c.l.b16 %v73
  %v310 = vunpack.c.l.b16 %v74
  %v311 = vunpack.c.l.b16 %v75
  %v312 = vunpack.c.l.b16 %v76
  %v313 = vunpack.c.l.b16 %v77
  %v314 = vunpack.c.l.b16 %v78
  %v315 = vunpack.c.l.b16 %v79
  %v316 = vunpack.c.l.b16 %v80
  %v317 = vunpack.c.l.b16 %v81
  %v318 = vunpack.c.l.b16 %v82
  %v319 = vunpack.c.l.b16 %v83
  %v320 = vunpack.c.l.b16 %v84
  %v321 = vunpack.c.l.b16 %v85
  %v322 = vunpack.c.l.b16 %v86
  %v323 = vunpack.c.l.b16 %v87
  %v324 = vpack.c.b16 %v289, %v288
  %v325 = vpack.c.b16 %v291, %v290
  %v326 = vpack.c.b16 %v293, %v292
  %v327 = vpack.c.b16 %v295, %v294
  %v328 = vpack.c.b16 %v297, %v296
  %v329 = vpack.c.b16 %v299, %v298
  %v330 = vpack.c.b16 %v301, %v300
  %v331 = vpack.c.b16 %v303, %v302
  %v332 = vpack.c.b16 %v305, %v304
  %v333 = vpack.c.b16 %v307, %v306
  %v334 = vpack.c.b16 %v309, %v308
  %v335 = vpack.c.b16 %v311, %v310
  %v336 = vpack.c.b16 %v313, %v312
  %v337 = vpack.c.b16 %v315, %v314
  %v338 = vpack.c.b16 %v317, %v316
  %v339 = vpack.c.b16 %v319, %v318
  %v340 = vpack.c.b16 %v321, %v320
  %v341 = vpack.c.b16 %v323, %v322
  %v378 = vunpack.c.l.b16 %v89
  %v379 = vunpack.c.l.b16 %v90
  %v380 = vunpack.c.l.b16 %v91
  %v381 = vunpack.c.l.b16 %v92
  %v382 = vunpack.c.l.b16 %v93
  %v383 = vunpack.c.l.b16 %v94
  %v384 = vunpack.c.l.b16 %v95
  %v385 = vunpack.c.l.b16 %v96
  %v386 = vunpack.c.l.b16 %v97
  %v387 = vunpack.c.l.b16 %v98
  %v388 = vunpack.c.l.b16 %v99
  %v389 = vunpack.c.l.b16 %v100
  %v390 = vunpack.c.l.b16 %v101
  %v391 = vunpack.c.l.b16 %v102
  %v392 = vunpack.c.l.b16 %v103
  %v393 = vunpack.c.l.b16 %v104
  %v394 = vunpack.c.l.b16 %v105
  %v395 = vunpack.c.l.b16 %v106
  %v396 = vunpack.c.l.b16 %v107
  %v397 = vunpack.c.l.b16 %v108
  %v398 = vunpack.c.l.b16 %v109
  %v399 = vunpack.c.l.b16 %v110
  %v400 = vunpack.c.l.b16 %v111
  %v401 = vunpack.c.l.b16 %v112
  %v402 = vunpack.c.l.b16 %v113
  %v403 = vunpack.c.l.b16 %v114
  %v404 = vunpack.c.l.b16 %v115
  %v405 = vunpack.c.l.b16 %v116
  %v406 = vunpack.c.l.b16 %v117
  %v407 = vunpack.c.l.b16 %v118
  %v408 = vunpack.c.l.b16 %v119
  %v409 = vunpack.c.l.b16 %v120
  %v410 = vunpack.c.l.b16 %v121
  %v411 = vunpack.c.l.b16 %v122
  %v412 = vunpack.c.l.b16 %v123
  %v413 = vunpack.c.l.b16 %v124
  %v414 = vpack.c.b16 %v379, %v378
  %v415 = vpack.c.b16 %v381, %v380
  %v416 = vpack.c.b16 %v383, %v382
  %v417 = vpack.c.b16 %v385, %v384
  %v418 = vpack.c.b16 %v387, %v386
  %v419 = vpack.c.b16 %v389, %v388
  %v420 = vpack.c.b16 %v391, %v390
  %v421 = vpack.c.b16 %v393, %v392
  %v422 = vpack.c.b16 %v395, %v394
  %v423 = vpack.c.b16 %v397, %v396
  %v424 = vpack.c.b16 %v399, %v398
  %v425 = vpack.c.b16 %v401, %v400
  %v426 = vpack.c.b16 %v403, %v402
  %v427 = vpack.c.b16 %v405, %v404
  %v428 = vpack.c.b16 %v407, %v406
  %v429 = vpack.c.b16 %v409, %v408
  %v430 = vpack.c.b16 %v411, %v410
  %v431 = vpack.c.b16 %v413, %v412
  %v468 = vunpack.c.l.b16 %v126
  %v469 = vunpack.c.l.b16 %v127
  %v470 = vunpack.c.l.b16 %v128
  %v471 = vunpack.c.l.b16 %v129
  %v472 = vunpack.c.l.b16 %v130
  %v473 = vunpack.c.l.b16 %v131
  %v474 = vunpack.c.l.b16 %v132
  %v475 = vunpack.c.l.b16 %v133
  %v476 = vunpack.c.l.b16 %v134
  %v477 = vunpack.c.l.b16 %v135
  %v478 = vunpack.c.l.b16 %v136
  %v479 = vunpack.c.l.b16 %v137
  %v480 = vunpack.c.l.b16 %v138
  %v481 = vunpack.c.l.b16 %v139
  %v482 = vunpack.c.l.b16 %v140
  %v483 = vunpack.c.l.b16 %v141
  %v484 = vunpack.c.l.b16 %v142
  %v485 = vunpack.c.l.b16 %v143
  %v486 = vunpack.c.l.b16 %v144
  %v487 = vunpack.c.l.b16 %v145
  %v488 = vunpack.c.l.b16 %v146
  %v489 = vunpack.c.l.b16 %v147
  %v490 = vunpack.c.l.b16 %v148
  %v491 = vunpack.c.l.b16 %v149
  %v492 = vunpack.c.l.b16 %v150
  %v493 = vunpack.c.l.b16 %v151
  %v494 = vunpack.c.l.b16 %v152
  %v495 = vunpack.c.l.b16 %v153
  %v496 = vunpack.c.l.b16 %v154
  %v497 = vunpack.c.l.b16 %v155
  %v498 = vunpack.c.l.b16 %v156
  %v499 = vunpack.c.l.b16 %v157
  %v500 = vunpack.c.l.b16 %v158
  %v501 = vunpack.c.l.b16 %v159
  %v502 = vunpack.c.l.b16 %v160
  %v503 = vunpack.c.l.b16 %v161
  %v504 = vpack.c.b16 %v469, %v468
  %v505 = vpack.c.b16 %v471, %v470
  %v506 = vpack.c.b16 %v473, %v472
  %v507 = vpack.c.b16 %v475, %v474
  %v508 = vpack.c.b16 %v477, %v476
  %v509 = vpack.c.b16 %v479, %v478
  %v510 = vpack.c.b16 %v481, %v480
  %v511 = vpack.c.b16 %v483, %v482
  %v512 = vpack.c.b16 %v485, %v484
  %v513 = vpack.c.b16 %v487, %v486
  %v514 = vpack.c.b16 %v489, %v488
  %v515 = vpack.c.b16 %v491, %v490
  %v516 = vpack.c.b16 %v493, %v492
  %v517 = vpack.c.b16 %v495, %v494
  %v518 = vpack.c.b16 %v497, %v496
  %v519 = vpack.c.b16 %v499, %v498
  %v520 = vpack.c.b16 %v501, %v500
  %v521 = vpack.c.b16 %v503, %v502
  %v522 = vld [vmem:[%s1] sm:$0xf]
  %v523 = vld [vmem:[%s1 + $0x4] sm:$0xf]
  %v524 = vld [vmem:[%s1 + $0x8] sm:$0xf]
  %v525 = vld [vmem:[%s1 + $0xc] sm:$0x1]
  %v530 = vunpack.c.l.b16 %v522
  %v531 = vunpack.c.l.b16 %v523
  %v532 = vunpack.c.l.b16 %v524
  %v533 = vunpack.c.l.b16 %v525
  %v534 = vpack.c.b16 %v531, %v530
  %v535 = vpack.c.b16 %v533, %v532
  %vm537 = vcmask 203776
  %v539 = vsel %vm537, %v234, 0
  %v542 = vsel %vm537, %v235, 0
  %v545 = vsel %vm537, %v236, 0
  %v548 = vsel %vm537, %v237, 0
  %v551 = vsel %vm537, %v238, 0
  %v554 = vsel %vm537, %v239, 0
  %v557 = vsel %vm537, %v240, 0
  %v560 = vsel %vm537, %v241, 0
  %v563 = vsel %vm537, %v242, 0
  %v566 = vsel %vm537, %v243, 0
  %v569 = vsel %vm537, %v244, 0
  %v572 = vsel %vm537, %v245, 0
  %v575 = vsel %vm537, %v246, 0
  %v578 = vsel %vm537, %v247, 0
  %v581 = vsel %vm537, %v248, 0
  %v584 = vsel %vm537, %v249, 0
  %v587 = vsel %vm537, %v250, 0
  %v590 = vsel %vm537, %v251, 0
  %v593 = vsel %vm537, %v324, 0
  %v596 = vsel %vm537, %v325, 0
  %v599 = vsel %vm537, %v326, 0
  %v602 = vsel %vm537, %v327, 0
  %v605 = vsel %vm537, %v328, 0
  %v608 = vsel %vm537, %v329, 0
  %v611 = vsel %vm537, %v330, 0
  %v614 = vsel %vm537, %v331, 0
  %v617 = vsel %vm537, %v332, 0
  %v620 = vsel %vm537, %v333, 0
  %v623 = vsel %vm537, %v334, 0
  %v626 = vsel %vm537, %v335, 0
  %v629 = vsel %vm537, %v336, 0
  %v632 = vsel %vm537, %v337, 0
  %v635 = vsel %vm537, %v338, 0
  %v638 = vsel %vm537, %v339, 0
  %v641 = vsel %vm537, %v340, 0
  %v644 = vsel %vm537, %v341, 0
  %v647 = vsel %vm537, %v414, 0
  %v650 = vsel %vm537, %v415, 0
  %v653 = vsel %vm537, %v416, 0
  %v656 = vsel %vm537, %v417, 0
  %v659 = vsel %vm537, %v418, 0
  %v662 = vsel %vm537, %v419, 0
  %v665 = vsel %vm537, %v420, 0
  %v668 = vsel %vm537, %v421, 0
  %v671 = vsel %vm537, %v422, 0
  %v674 = vsel %vm537, %v423, 0
  %v677 = vsel %vm537, %v424, 0
  %v680 = vsel %vm537, %v425, 0
  %v683 = vsel %vm537, %v426, 0
  %v686 = vsel %vm537, %v427, 0
  %v689 = vsel %vm537, %v428, 0
  %v692 = vsel %vm537, %v429, 0
  %v695 = vsel %vm537, %v430, 0
  %v698 = vsel %vm537, %v431, 0
  %v701 = vsel %vm537, %v504, 0
  %v704 = vsel %vm537, %v505, 0
  %v707 = vsel %vm537, %v506, 0
  %v710 = vsel %vm537, %v507, 0
  %v713 = vsel %vm537, %v508, 0
  %v716 = vsel %vm537, %v509, 0
  %v719 = vsel %vm537, %v510, 0
  %v722 = vsel %vm537, %v511, 0
  %v725 = vsel %vm537, %v512, 0
  %v728 = vsel %vm537, %v513, 0
  %v731 = vsel %vm537, %v514, 0
  %v734 = vsel %vm537, %v515, 0
  %v737 = vsel %vm537, %v516, 0
  %v740 = vsel %vm537, %v517, 0
  %v743 = vsel %vm537, %v518, 0
  %v746 = vsel %vm537, %v519, 0
  %v749 = vsel %vm537, %v520, 0
  %v752 = vsel %vm537, %v521, 0
  %vm754 = vcmask 1043456
  %vm755 = vcmask 1044480
  %v756 = vsel %vm754, 4294967295, 65535
  %v757 = vsel %vm755, %v756, 0
  %v759 = vand.u32 %v535, %v757
  %761 = vmatprep.subr.bf16.mxu0 0
  %762 = vmatpush1.bf16.msra.mxu0 0
  %763 = vmatprep.subr.bf16.mxu0 0
  %764 = vmatpush1.bf16.msra.mxu0 0
  %765 = vmatprep.subr.bf16.mxu0 0
  %766 = vmatpush1.bf16.msra.mxu0 0
  %767 = vmatprep.subr.bf16.mxu0 0
  %768 = vmatpush1.bf16.msra.mxu0 0
  %769 = vmatprep.subr.bf16.mxu0 0
  %770 = vmatpush1.bf16.msra.mxu0 0
  %771 = vmatprep.subr.bf16.mxu0 0
  %772 = vmatpush1.bf16.msra.mxu0 0
  %773 = vmatprep.subr.bf16.mxu0 0
  %774 = vmatpush1.bf16.msra.mxu0 %v759
  %775 = vmatprep.subr.bf16.mxu0 0
  %776 = vmatpush1.bf16.msra.mxu0 %v534
  %777 = vmatprep.subr.bf16.mxu0 0
  %778 = vmatpush2.bf16.msra.mxu0 0
  %779 = vmatprep.subr.bf16.mxu0 0
  %780 = vmatpush2.bf16.msra.mxu0 0
  %781 = vmatprep.subr.bf16.mxu0 0
  %782 = vmatpush2.bf16.msra.mxu0 0
  %783 = vmatprep.subr.bf16.mxu0 0
  %784 = vmatpush2.bf16.msra.mxu0 0
  %785 = vmatprep.subr.bf16.mxu0 0
  %786 = vmatpush2.bf16.msra.mxu0 0
  %787 = vmatprep.subr.bf16.mxu0 0
  %788 = vmatpush2.bf16.msra.mxu0 0
  %789 = vmatprep.subr.bf16.mxu0 0
  %790 = vmatpush2.bf16.msra.mxu0 0
  %791 = vmatprep.subr.bf16.mxu0 0
  %792 = vmatpush2.bf16.msra.mxu0 0
  %793 = vmatprep.mubr.bf16.mxu0 0
  %794 = vmatmul.mubr.bf16.gmra.mxu0 %v539
  %v795 = vpop.f32.mrf.mxu0
  %v796 = vadd.f32 0.0, %v795
  %v797 = vpop.f32.mrf.mxu0
  %v798 = vpop.f32.mrf.mxu0
  %v799 = vadd.f32 0.0, %v798
  %v800 = vpop.f32.mrf.mxu0
  %801 = vmatprep.mubr.bf16.mxu0 0
  %802 = vmatmul.mubr.bf16.gmra.mxu0 %v542
  %v803 = vpop.f32.mrf.mxu0
  %v804 = vadd.f32 0.0, %v803
  %v805 = vpop.f32.mrf.mxu0
  %v806 = vpop.f32.mrf.mxu0
  %v807 = vadd.f32 0.0, %v806
  %v808 = vpop.f32.mrf.mxu0
  %809 = vmatprep.mubr.bf16.mxu0 0
  %810 = vmatmul.mubr.bf16.gmra.mxu0 %v545
  %v811 = vpop.f32.mrf.mxu0
  %v812 = vadd.f32 0.0, %v811
  %v813 = vpop.f32.mrf.mxu0
  %v814 = vpop.f32.mrf.mxu0
  %v815 = vadd.f32 0.0, %v814
  %v816 = vpop.f32.mrf.mxu0
  %817 = vmatprep.mubr.bf16.mxu0 0
  %818 = vmatmul.mubr.bf16.gmra.mxu0 %v548
  %v819 = vpop.f32.mrf.mxu0
  %v820 = vadd.f32 0.0, %v819
  %v821 = vpop.f32.mrf.mxu0
  %v822 = vpop.f32.mrf.mxu0
  %v823 = vadd.f32 0.0, %v822
  %v824 = vpop.f32.mrf.mxu0
  %825 = vmatprep.mubr.bf16.mxu0 0
  %826 = vmatmul.mubr.bf16.gmra.mxu0 %v551
  %v827 = vpop.f32.mrf.mxu0
  %v828 = vadd.f32 0.0, %v827
  %v829 = vpop.f32.mrf.mxu0
  %v830 = vpop.f32.mrf.mxu0
  %v831 = vadd.f32 0.0, %v830
  %v832 = vpop.f32.mrf.mxu0
  %833 = vmatprep.mubr.bf16.mxu0 0
  %834 = vmatmul.mubr.bf16.gmra.mxu0 %v554
  %v835 = vpop.f32.mrf.mxu0
  %v836 = vadd.f32 0.0, %v835
  %v837 = vpop.f32.mrf.mxu0
  %v838 = vpop.f32.mrf.mxu0
  %v839 = vadd.f32 0.0, %v838
  %v840 = vpop.f32.mrf.mxu0
  %841 = vmatprep.mubr.bf16.mxu0 0
  %842 = vmatmul.mubr.bf16.gmra.mxu0 %v557
  %v843 = vpop.f32.mrf.mxu0
  %v844 = vadd.f32 0.0, %v843
  %v845 = vpop.f32.mrf.mxu0
  %v846 = vpop.f32.mrf.mxu0
  %v847 = vadd.f32 0.0, %v846
  %v848 = vpop.f32.mrf.mxu0
  %849 = vmatprep.mubr.bf16.mxu0 0
  %850 = vmatmul.mubr.bf16.gmra.mxu0 %v560
  %v851 = vpop.f32.mrf.mxu0
  %v852 = vadd.f32 0.0, %v851
  %v853 = vpop.f32.mrf.mxu0
  %v854 = vpop.f32.mrf.mxu0
  %v855 = vadd.f32 0.0, %v854
  %v856 = vpop.f32.mrf.mxu0
  %857 = vmatprep.mubr.bf16.mxu0 0
  %858 = vmatmul.mubr.bf16.gmra.mxu0 %v563
  %v859 = vpop.f32.mrf.mxu0
  %v860 = vadd.f32 0.0, %v859
  %v861 = vpop.f32.mrf.mxu0
  %v862 = vpop.f32.mrf.mxu0
  %v863 = vadd.f32 0.0, %v862
  %v864 = vpop.f32.mrf.mxu0
  %865 = vmatprep.mubr.bf16.mxu0 0
  %866 = vmatmul.mubr.bf16.gmra.mxu0 %v566
  %v867 = vpop.f32.mrf.mxu0
  %v868 = vadd.f32 0.0, %v867
  %v869 = vpop.f32.mrf.mxu0
  %v870 = vpop.f32.mrf.mxu0
  %v871 = vadd.f32 0.0, %v870
  %v872 = vpop.f32.mrf.mxu0
  %873 = vmatprep.mubr.bf16.mxu0 0
  %874 = vmatmul.mubr.bf16.gmra.mxu0 %v569
  %v875 = vpop.f32.mrf.mxu0
  %v876 = vadd.f32 0.0, %v875
  %v877 = vpop.f32.mrf.mxu0
  %v878 = vpop.f32.mrf.mxu0
  %v879 = vadd.f32 0.0, %v878
  %v880 = vpop.f32.mrf.mxu0
  %881 = vmatprep.mubr.bf16.mxu0 0
  %882 = vmatmul.mubr.bf16.gmra.mxu0 %v572
  %v883 = vpop.f32.mrf.mxu0
  %v884 = vadd.f32 0.0, %v883
  %v885 = vpop.f32.mrf.mxu0
  %v886 = vpop.f32.mrf.mxu0
  %v887 = vadd.f32 0.0, %v886
  %v888 = vpop.f32.mrf.mxu0
  %889 = vmatprep.mubr.bf16.mxu0 0
  %890 = vmatmul.mubr.bf16.gmra.mxu0 %v575
  %v891 = vpop.f32.mrf.mxu0
  %v892 = vadd.f32 0.0, %v891
  %v893 = vpop.f32.mrf.mxu0
  %v894 = vpop.f32.mrf.mxu0
  %v895 = vadd.f32 0.0, %v894
  %v896 = vpop.f32.mrf.mxu0
  %897 = vmatprep.mubr.bf16.mxu0 0
  %898 = vmatmul.mubr.bf16.gmra.mxu0 %v578
  %v899 = vpop.f32.mrf.mxu0
  %v900 = vadd.f32 0.0, %v899
  %v901 = vpop.f32.mrf.mxu0
  %v902 = vpop.f32.mrf.mxu0
  %v903 = vadd.f32 0.0, %v902
  %v904 = vpop.f32.mrf.mxu0
  %905 = vmatprep.mubr.bf16.mxu0 0
  %906 = vmatmul.mubr.bf16.gmra.mxu0 %v581
  %v907 = vpop.f32.mrf.mxu0
  %v908 = vadd.f32 0.0, %v907
  %v909 = vpop.f32.mrf.mxu0
  %v910 = vpop.f32.mrf.mxu0
  %v911 = vadd.f32 0.0, %v910
  %v912 = vpop.f32.mrf.mxu0
  %913 = vmatprep.mubr.bf16.mxu0 0
  %914 = vmatmul.mubr.bf16.gmra.mxu0 %v584
  %v915 = vpop.f32.mrf.mxu0
  %v916 = vadd.f32 0.0, %v915
  %v917 = vpop.f32.mrf.mxu0
  %v918 = vpop.f32.mrf.mxu0
  %v919 = vadd.f32 0.0, %v918
  %v920 = vpop.f32.mrf.mxu0
  %921 = vmatprep.mubr.bf16.mxu0 0
  %922 = vmatmul.mubr.bf16.gmra.mxu0 %v587
  %v923 = vpop.f32.mrf.mxu0
  %v924 = vadd.f32 0.0, %v923
  %v925 = vpop.f32.mrf.mxu0
  %v926 = vpop.f32.mrf.mxu0
  %v927 = vadd.f32 0.0, %v926
  %v928 = vpop.f32.mrf.mxu0
  %929 = vmatprep.mubr.bf16.mxu0 0
  %930 = vmatmul.mubr.bf16.gmra.mxu0 %v590
  %v931 = vpop.f32.mrf.mxu0
  %v932 = vadd.f32 0.0, %v931
  %v933 = vpop.f32.mrf.mxu0
  %v934 = vpop.f32.mrf.mxu0
  %v935 = vadd.f32 0.0, %v934
  %v936 = vpop.f32.mrf.mxu0
  %937 = vmatprep.mubr.bf16.mxu0 0
  %938 = vmatmul.mubr.bf16.gmra.mxu0 %v593
  %v939 = vpop.f32.mrf.mxu0
  %v940 = vadd.f32 0.0, %v939
  %v941 = vpop.f32.mrf.mxu0
  %v942 = vpop.f32.mrf.mxu0
  %v943 = vadd.f32 0.0, %v942
  %v944 = vpop.f32.mrf.mxu0
  %945 = vmatprep.mubr.bf16.mxu0 0
  %946 = vmatmul.mubr.bf16.gmra.mxu0 %v596
  %v947 = vpop.f32.mrf.mxu0
  %v948 = vadd.f32 0.0, %v947
  %v949 = vpop.f32.mrf.mxu0
  %v950 = vpop.f32.mrf.mxu0
  %v951 = vadd.f32 0.0, %v950
  %v952 = vpop.f32.mrf.mxu0
  %953 = vmatprep.mubr.bf16.mxu0 0
  %954 = vmatmul.mubr.bf16.gmra.mxu0 %v599
  %v955 = vpop.f32.mrf.mxu0
  %v956 = vadd.f32 0.0, %v955
  %v957 = vpop.f32.mrf.mxu0
  %v958 = vpop.f32.mrf.mxu0
  %v959 = vadd.f32 0.0, %v958
  %v960 = vpop.f32.mrf.mxu0
  %961 = vmatprep.mubr.bf16.mxu0 0
  %962 = vmatmul.mubr.bf16.gmra.mxu0 %v602
  %v963 = vpop.f32.mrf.mxu0
  %v964 = vadd.f32 0.0, %v963
  %v965 = vpop.f32.mrf.mxu0
  %v966 = vpop.f32.mrf.mxu0
  %v967 = vadd.f32 0.0, %v966
  %v968 = vpop.f32.mrf.mxu0
  %969 = vmatprep.mubr.bf16.mxu0 0
  %970 = vmatmul.mubr.bf16.gmra.mxu0 %v605
  %v971 = vpop.f32.mrf.mxu0
  %v972 = vadd.f32 0.0, %v971
  %v973 = vpop.f32.mrf.mxu0
  %v974 = vpop.f32.mrf.mxu0
  %v975 = vadd.f32 0.0, %v974
  %v976 = vpop.f32.mrf.mxu0
  %977 = vmatprep.mubr.bf16.mxu0 0
  %978 = vmatmul.mubr.bf16.gmra.mxu0 %v608
  %v979 = vpop.f32.mrf.mxu0
  %v980 = vadd.f32 0.0, %v979
  %v981 = vpop.f32.mrf.mxu0
  %v982 = vpop.f32.mrf.mxu0
  %v983 = vadd.f32 0.0, %v982
  %v984 = vpop.f32.mrf.mxu0
  %985 = vmatprep.mubr.bf16.mxu0 0
  %986 = vmatmul.mubr.bf16.gmra.mxu0 %v611
  %v987 = vpop.f32.mrf.mxu0
  %v988 = vadd.f32 0.0, %v987
  %v989 = vpop.f32.mrf.mxu0
  %v990 = vpop.f32.mrf.mxu0
  %v991 = vadd.f32 0.0, %v990
  %v992 = vpop.f32.mrf.mxu0
  %993 = vmatprep.mubr.bf16.mxu0 0
  %994 = vmatmul.mubr.bf16.gmra.mxu0 %v614
  %v995 = vpop.f32.mrf.mxu0
  %v996 = vadd.f32 0.0, %v995
  %v997 = vpop.f32.mrf.mxu0
  %v998 = vpop.f32.mrf.mxu0
  %v999 = vadd.f32 0.0, %v998
  %v1000 = vpop.f32.mrf.mxu0
  %1001 = vmatprep.mubr.bf16.mxu0 0
  %1002 = vmatmul.mubr.bf16.gmra.mxu0 %v617
  %v1003 = vpop.f32.mrf.mxu0
  %v1004 = vadd.f32 0.0, %v1003
  %v1005 = vpop.f32.mrf.mxu0
  %v1006 = vpop.f32.mrf.mxu0
  %v1007 = vadd.f32 0.0, %v1006
  %v1008 = vpop.f32.mrf.mxu0
  %1009 = vmatprep.mubr.bf16.mxu0 0
  %1010 = vmatmul.mubr.bf16.gmra.mxu0 %v620
  %v1011 = vpop.f32.mrf.mxu0
  %v1012 = vadd.f32 0.0, %v1011
  %v1013 = vpop.f32.mrf.mxu0
  %v1014 = vpop.f32.mrf.mxu0
  %v1015 = vadd.f32 0.0, %v1014
  %v1016 = vpop.f32.mrf.mxu0
  %1017 = vmatprep.mubr.bf16.mxu0 0
  %1018 = vmatmul.mubr.bf16.gmra.mxu0 %v623
  %v1019 = vpop.f32.mrf.mxu0
  %v1020 = vadd.f32 0.0, %v1019
  %v1021 = vpop.f32.mrf.mxu0
  %v1022 = vpop.f32.mrf.mxu0
  %v1023 = vadd.f32 0.0, %v1022
  %v1024 = vpop.f32.mrf.mxu0
  %1025 = vmatprep.mubr.bf16.mxu0 0
  %1026 = vmatmul.mubr.bf16.gmra.mxu0 %v626
  %v1027 = vpop.f32.mrf.mxu0
  %v1028 = vadd.f32 0.0, %v1027
  %v1029 = vpop.f32.mrf.mxu0
  %v1030 = vpop.f32.mrf.mxu0
  %v1031 = vadd.f32 0.0, %v1030
  %v1032 = vpop.f32.mrf.mxu0
  %1033 = vmatprep.mubr.bf16.mxu0 0
  %1034 = vmatmul.mubr.bf16.gmra.mxu0 %v629
  %v1035 = vpop.f32.mrf.mxu0
  %v1036 = vadd.f32 0.0, %v1035
  %v1037 = vpop.f32.mrf.mxu0
  %v1038 = vpop.f32.mrf.mxu0
  %v1039 = vadd.f32 0.0, %v1038
  %v1040 = vpop.f32.mrf.mxu0
  %1041 = vmatprep.mubr.bf16.mxu0 0
  %1042 = vmatmul.mubr.bf16.gmra.mxu0 %v632
  %v1043 = vpop.f32.mrf.mxu0
  %v1044 = vadd.f32 0.0, %v1043
  %v1045 = vpop.f32.mrf.mxu0
  %v1046 = vpop.f32.mrf.mxu0
  %v1047 = vadd.f32 0.0, %v1046
  %v1048 = vpop.f32.mrf.mxu0
  %1049 = vmatprep.mubr.bf16.mxu0 0
  %1050 = vmatmul.mubr.bf16.gmra.mxu0 %v635
  %v1051 = vpop.f32.mrf.mxu0
  %v1052 = vadd.f32 0.0, %v1051
  %v1053 = vpop.f32.mrf.mxu0
  %v1054 = vpop.f32.mrf.mxu0
  %v1055 = vadd.f32 0.0, %v1054
  %v1056 = vpop.f32.mrf.mxu0
  %1057 = vmatprep.mubr.bf16.mxu0 0
  %1058 = vmatmul.mubr.bf16.gmra.mxu0 %v638
  %v1059 = vpop.f32.mrf.mxu0
  %v1060 = vadd.f32 0.0, %v1059
  %v1061 = vpop.f32.mrf.mxu0
  %v1062 = vpop.f32.mrf.mxu0
  %v1063 = vadd.f32 0.0, %v1062
  %v1064 = vpop.f32.mrf.mxu0
  %1065 = vmatprep.mubr.bf16.mxu0 0
  %1066 = vmatmul.mubr.bf16.gmra.mxu0 %v641
  %v1067 = vpop.f32.mrf.mxu0
  %v1068 = vadd.f32 0.0, %v1067
  %v1069 = vpop.f32.mrf.mxu0
  %v1070 = vpop.f32.mrf.mxu0
  %v1071 = vadd.f32 0.0, %v1070
  %v1072 = vpop.f32.mrf.mxu0
  %1073 = vmatprep.mubr.bf16.mxu0 0
  %1074 = vmatmul.mubr.bf16.gmra.mxu0 %v644
  %v1075 = vpop.f32.mrf.mxu0
  %v1076 = vadd.f32 0.0, %v1075
  %v1077 = vpop.f32.mrf.mxu0
  %v1078 = vpop.f32.mrf.mxu0
  %v1079 = vadd.f32 0.0, %v1078
  %v1080 = vpop.f32.mrf.mxu0
  %1081 = vmatprep.mubr.bf16.mxu0 0
  %1082 = vmatmul.mubr.bf16.gmra.mxu0 %v647
  %v1083 = vpop.f32.mrf.mxu0
  %v1084 = vadd.f32 0.0, %v1083
  %v1085 = vpop.f32.mrf.mxu0
  %v1086 = vpop.f32.mrf.mxu0
  %v1087 = vadd.f32 0.0, %v1086
  %v1088 = vpop.f32.mrf.mxu0
  %1089 = vmatprep.mubr.bf16.mxu0 0
  %1090 = vmatmul.mubr.bf16.gmra.mxu0 %v650
  %v1091 = vpop.f32.mrf.mxu0
  %v1092 = vadd.f32 0.0, %v1091
  %v1093 = vpop.f32.mrf.mxu0
  %v1094 = vpop.f32.mrf.mxu0
  %v1095 = vadd.f32 0.0, %v1094
  %v1096 = vpop.f32.mrf.mxu0
  %1097 = vmatprep.mubr.bf16.mxu0 0
  %1098 = vmatmul.mubr.bf16.gmra.mxu0 %v653
  %v1099 = vpop.f32.mrf.mxu0
  %v1100 = vadd.f32 0.0, %v1099
  %v1101 = vpop.f32.mrf.mxu0
  %v1102 = vpop.f32.mrf.mxu0
  %v1103 = vadd.f32 0.0, %v1102
  %v1104 = vpop.f32.mrf.mxu0
  %1105 = vmatprep.mubr.bf16.mxu0 0
  %1106 = vmatmul.mubr.bf16.gmra.mxu0 %v656
  %v1107 = vpop.f32.mrf.mxu0
  %v1108 = vadd.f32 0.0, %v1107
  %v1109 = vpop.f32.mrf.mxu0
  %v1110 = vpop.f32.mrf.mxu0
  %v1111 = vadd.f32 0.0, %v1110
  %v1112 = vpop.f32.mrf.mxu0
  %1113 = vmatprep.mubr.bf16.mxu0 0
  %1114 = vmatmul.mubr.bf16.gmra.mxu0 %v659
  %v1115 = vpop.f32.mrf.mxu0
  %v1116 = vadd.f32 0.0, %v1115
  %v1117 = vpop.f32.mrf.mxu0
  %v1118 = vpop.f32.mrf.mxu0
  %v1119 = vadd.f32 0.0, %v1118
  %v1120 = vpop.f32.mrf.mxu0
  %1121 = vmatprep.mubr.bf16.mxu0 0
  %1122 = vmatmul.mubr.bf16.gmra.mxu0 %v662
  %v1123 = vpop.f32.mrf.mxu0
  %v1124 = vadd.f32 0.0, %v1123
  %v1125 = vpop.f32.mrf.mxu0
  %v1126 = vpop.f32.mrf.mxu0
  %v1127 = vadd.f32 0.0, %v1126
  %v1128 = vpop.f32.mrf.mxu0
  %1129 = vmatprep.mubr.bf16.mxu0 0
  %1130 = vmatmul.mubr.bf16.gmra.mxu0 %v665
  %v1131 = vpop.f32.mrf.mxu0
  %v1132 = vadd.f32 0.0, %v1131
  %v1133 = vpop.f32.mrf.mxu0
  %v1134 = vpop.f32.mrf.mxu0
  %v1135 = vadd.f32 0.0, %v1134
  %v1136 = vpop.f32.mrf.mxu0
  %1137 = vmatprep.mubr.bf16.mxu0 0
  %1138 = vmatmul.mubr.bf16.gmra.mxu0 %v668
  %v1139 = vpop.f32.mrf.mxu0
  %v1140 = vadd.f32 0.0, %v1139
  %v1141 = vpop.f32.mrf.mxu0
  %v1142 = vpop.f32.mrf.mxu0
  %v1143 = vadd.f32 0.0, %v1142
  %v1144 = vpop.f32.mrf.mxu0
  %1145 = vmatprep.mubr.bf16.mxu0 0
  %1146 = vmatmul.mubr.bf16.gmra.mxu0 %v671
  %v1147 = vpop.f32.mrf.mxu0
  %v1148 = vadd.f32 0.0, %v1147
  %v1149 = vpop.f32.mrf.mxu0
  %v1150 = vpop.f32.mrf.mxu0
  %v1151 = vadd.f32 0.0, %v1150
  %v1152 = vpop.f32.mrf.mxu0
  %1153 = vmatprep.mubr.bf16.mxu0 0
  %1154 = vmatmul.mubr.bf16.gmra.mxu0 %v674
  %v1155 = vpop.f32.mrf.mxu0
  %v1156 = vadd.f32 0.0, %v1155
  %v1157 = vpop.f32.mrf.mxu0
  %v1158 = vpop.f32.mrf.mxu0
  %v1159 = vadd.f32 0.0, %v1158
  %v1160 = vpop.f32.mrf.mxu0
  %1161 = vmatprep.mubr.bf16.mxu0 0
  %1162 = vmatmul.mubr.bf16.gmra.mxu0 %v677
  %v1163 = vpop.f32.mrf.mxu0
  %v1164 = vadd.f32 0.0, %v1163
  %v1165 = vpop.f32.mrf.mxu0
  %v1166 = vpop.f32.mrf.mxu0
  %v1167 = vadd.f32 0.0, %v1166
  %v1168 = vpop.f32.mrf.mxu0
  %1169 = vmatprep.mubr.bf16.mxu0 0
  %1170 = vmatmul.mubr.bf16.gmra.mxu0 %v680
  %v1171 = vpop.f32.mrf.mxu0
  %v1172 = vadd.f32 0.0, %v1171
  %v1173 = vpop.f32.mrf.mxu0
  %v1174 = vpop.f32.mrf.mxu0
  %v1175 = vadd.f32 0.0, %v1174
  %v1176 = vpop.f32.mrf.mxu0
  %1177 = vmatprep.mubr.bf16.mxu0 0
  %1178 = vmatmul.mubr.bf16.gmra.mxu0 %v683
  %v1179 = vpop.f32.mrf.mxu0
  %v1180 = vadd.f32 0.0, %v1179
  %v1181 = vpop.f32.mrf.mxu0
  %v1182 = vpop.f32.mrf.mxu0
  %v1183 = vadd.f32 0.0, %v1182
  %v1184 = vpop.f32.mrf.mxu0
  %1185 = vmatprep.mubr.bf16.mxu0 0
  %1186 = vmatmul.mubr.bf16.gmra.mxu0 %v686
  %v1187 = vpop.f32.mrf.mxu0
  %v1188 = vadd.f32 0.0, %v1187
  %v1189 = vpop.f32.mrf.mxu0
  %v1190 = vpop.f32.mrf.mxu0
  %v1191 = vadd.f32 0.0, %v1190
  %v1192 = vpop.f32.mrf.mxu0
  %1193 = vmatprep.mubr.bf16.mxu0 0
  %1194 = vmatmul.mubr.bf16.gmra.mxu0 %v689
  %v1195 = vpop.f32.mrf.mxu0
  %v1196 = vadd.f32 0.0, %v1195
  %v1197 = vpop.f32.mrf.mxu0
  %v1198 = vpop.f32.mrf.mxu0
  %v1199 = vadd.f32 0.0, %v1198
  %v1200 = vpop.f32.mrf.mxu0
  %1201 = vmatprep.mubr.bf16.mxu0 0
  %1202 = vmatmul.mubr.bf16.gmra.mxu0 %v692
  %v1203 = vpop.f32.mrf.mxu0
  %v1204 = vadd.f32 0.0, %v1203
  %v1205 = vpop.f32.mrf.mxu0
  %v1206 = vpop.f32.mrf.mxu0
  %v1207 = vadd.f32 0.0, %v1206
  %v1208 = vpop.f32.mrf.mxu0
  %1209 = vmatprep.mubr.bf16.mxu0 0
  %1210 = vmatmul.mubr.bf16.gmra.mxu0 %v695
  %v1211 = vpop.f32.mrf.mxu0
  %v1212 = vadd.f32 0.0, %v1211
  %v1213 = vpop.f32.mrf.mxu0
  %v1214 = vpop.f32.mrf.mxu0
  %v1215 = vadd.f32 0.0, %v1214
  %v1216 = vpop.f32.mrf.mxu0
  %1217 = vmatprep.mubr.bf16.mxu0 0
  %1218 = vmatmul.mubr.bf16.gmra.mxu0 %v698
  %v1219 = vpop.f32.mrf.mxu0
  %v1220 = vadd.f32 0.0, %v1219
  %v1221 = vpop.f32.mrf.mxu0
  %v1222 = vpop.f32.mrf.mxu0
  %v1223 = vadd.f32 0.0, %v1222
  %v1224 = vpop.f32.mrf.mxu0
  %1225 = vmatprep.mubr.bf16.mxu0 0
  %1226 = vmatmul.mubr.bf16.gmra.mxu0 %v701
  %v1227 = vpop.f32.mrf.mxu0
  %v1228 = vadd.f32 0.0, %v1227
  %v1229 = vpop.f32.mrf.mxu0
  %v1230 = vpop.f32.mrf.mxu0
  %v1231 = vadd.f32 0.0, %v1230
  %v1232 = vpop.f32.mrf.mxu0
  %1233 = vmatprep.mubr.bf16.mxu0 0
  %1234 = vmatmul.mubr.bf16.gmra.mxu0 %v704
  %v1235 = vpop.f32.mrf.mxu0
  %v1236 = vadd.f32 0.0, %v1235
  %v1237 = vpop.f32.mrf.mxu0
  %v1238 = vpop.f32.mrf.mxu0
  %v1239 = vadd.f32 0.0, %v1238
  %v1240 = vpop.f32.mrf.mxu0
  %1241 = vmatprep.mubr.bf16.mxu0 0
  %1242 = vmatmul.mubr.bf16.gmra.mxu0 %v707
  %v1243 = vpop.f32.mrf.mxu0
  %v1244 = vadd.f32 0.0, %v1243
  %v1245 = vpop.f32.mrf.mxu0
  %v1246 = vpop.f32.mrf.mxu0
  %v1247 = vadd.f32 0.0, %v1246
  %v1248 = vpop.f32.mrf.mxu0
  %1249 = vmatprep.mubr.bf16.mxu0 0
  %1250 = vmatmul.mubr.bf16.gmra.mxu0 %v710
  %v1251 = vpop.f32.mrf.mxu0
  %v1252 = vadd.f32 0.0, %v1251
  %v1253 = vpop.f32.mrf.mxu0
  %v1254 = vpop.f32.mrf.mxu0
  %v1255 = vadd.f32 0.0, %v1254
  %v1256 = vpop.f32.mrf.mxu0
  %1257 = vmatprep.mubr.bf16.mxu0 0
  %1258 = vmatmul.mubr.bf16.gmra.mxu0 %v713
  %v1259 = vpop.f32.mrf.mxu0
  %v1260 = vadd.f32 0.0, %v1259
  %v1261 = vpop.f32.mrf.mxu0
  %v1262 = vpop.f32.mrf.mxu0
  %v1263 = vadd.f32 0.0, %v1262
  %v1264 = vpop.f32.mrf.mxu0
  %1265 = vmatprep.mubr.bf16.mxu0 0
  %1266 = vmatmul.mubr.bf16.gmra.mxu0 %v716
  %v1267 = vpop.f32.mrf.mxu0
  %v1268 = vadd.f32 0.0, %v1267
  %v1269 = vpop.f32.mrf.mxu0
  %v1270 = vpop.f32.mrf.mxu0
  %v1271 = vadd.f32 0.0, %v1270
  %v1272 = vpop.f32.mrf.mxu0
  %1273 = vmatprep.mubr.bf16.mxu0 0
  %1274 = vmatmul.mubr.bf16.gmra.mxu0 %v719
  %v1275 = vpop.f32.mrf.mxu0
  %v1276 = vadd.f32 0.0, %v1275
  %v1277 = vpop.f32.mrf.mxu0
  %v1278 = vpop.f32.mrf.mxu0
  %v1279 = vadd.f32 0.0, %v1278
  %v1280 = vpop.f32.mrf.mxu0
  %1281 = vmatprep.mubr.bf16.mxu0 0
  %1282 = vmatmul.mubr.bf16.gmra.mxu0 %v722
  %v1283 = vpop.f32.mrf.mxu0
  %v1284 = vadd.f32 0.0, %v1283
  %v1285 = vpop.f32.mrf.mxu0
  %v1286 = vpop.f32.mrf.mxu0
  %v1287 = vadd.f32 0.0, %v1286
  %v1288 = vpop.f32.mrf.mxu0
  %1289 = vmatprep.mubr.bf16.mxu0 0
  %1290 = vmatmul.mubr.bf16.gmra.mxu0 %v725
  %v1291 = vpop.f32.mrf.mxu0
  %v1292 = vadd.f32 0.0, %v1291
  %v1293 = vpop.f32.mrf.mxu0
  %v1294 = vpop.f32.mrf.mxu0
  %v1295 = vadd.f32 0.0, %v1294
  %v1296 = vpop.f32.mrf.mxu0
  %1297 = vmatprep.mubr.bf16.mxu0 0
  %1298 = vmatmul.mubr.bf16.gmra.mxu0 %v728
  %v1299 = vpop.f32.mrf.mxu0
  %v1300 = vadd.f32 0.0, %v1299
  %v1301 = vpop.f32.mrf.mxu0
  %v1302 = vpop.f32.mrf.mxu0
  %v1303 = vadd.f32 0.0, %v1302
  %v1304 = vpop.f32.mrf.mxu0
  %1305 = vmatprep.mubr.bf16.mxu0 0
  %1306 = vmatmul.mubr.bf16.gmra.mxu0 %v731
  %v1307 = vpop.f32.mrf.mxu0
  %v1308 = vadd.f32 0.0, %v1307
  %v1309 = vpop.f32.mrf.mxu0
  %v1310 = vpop.f32.mrf.mxu0
  %v1311 = vadd.f32 0.0, %v1310
  %v1312 = vpop.f32.mrf.mxu0
  %1313 = vmatprep.mubr.bf16.mxu0 0
  %1314 = vmatmul.mubr.bf16.gmra.mxu0 %v734
  %v1315 = vpop.f32.mrf.mxu0
  %v1316 = vadd.f32 0.0, %v1315
  %v1317 = vpop.f32.mrf.mxu0
  %v1318 = vpop.f32.mrf.mxu0
  %v1319 = vadd.f32 0.0, %v1318
  %v1320 = vpop.f32.mrf.mxu0
  %1321 = vmatprep.mubr.bf16.mxu0 0
  %1322 = vmatmul.mubr.bf16.gmra.mxu0 %v737
  %v1323 = vpop.f32.mrf.mxu0
  %v1324 = vadd.f32 0.0, %v1323
  %v1325 = vpop.f32.mrf.mxu0
  %v1326 = vpop.f32.mrf.mxu0
  %v1327 = vadd.f32 0.0, %v1326
  %v1328 = vpop.f32.mrf.mxu0
  %1329 = vmatprep.mubr.bf16.mxu0 0
  %1330 = vmatmul.mubr.bf16.gmra.mxu0 %v740
  %v1331 = vpop.f32.mrf.mxu0
  %v1332 = vadd.f32 0.0, %v1331
  %v1333 = vpop.f32.mrf.mxu0
  %v1334 = vpop.f32.mrf.mxu0
  %v1335 = vadd.f32 0.0, %v1334
  %v1336 = vpop.f32.mrf.mxu0
  %1337 = vmatprep.mubr.bf16.mxu0 0
  %1338 = vmatmul.mubr.bf16.gmra.mxu0 %v743
  %v1339 = vpop.f32.mrf.mxu0
  %v1340 = vadd.f32 0.0, %v1339
  %v1341 = vpop.f32.mrf.mxu0
  %v1342 = vpop.f32.mrf.mxu0
  %v1343 = vadd.f32 0.0, %v1342
  %v1344 = vpop.f32.mrf.mxu0
  %1345 = vmatprep.mubr.bf16.mxu0 0
  %1346 = vmatmul.mubr.bf16.gmra.mxu0 %v746
  %v1347 = vpop.f32.mrf.mxu0
  %v1348 = vadd.f32 0.0, %v1347
  %v1349 = vpop.f32.mrf.mxu0
  %v1350 = vpop.f32.mrf.mxu0
  %v1351 = vadd.f32 0.0, %v1350
  %v1352 = vpop.f32.mrf.mxu0
  %1353 = vmatprep.mubr.bf16.mxu0 0
  %1354 = vmatmul.mubr.bf16.gmra.mxu0 %v749
  %v1355 = vpop.f32.mrf.mxu0
  %v1356 = vadd.f32 0.0, %v1355
  %v1357 = vpop.f32.mrf.mxu0
  %v1358 = vpop.f32.mrf.mxu0
  %v1359 = vadd.f32 0.0, %v1358
  %v1360 = vpop.f32.mrf.mxu0
  %1361 = vmatprep.mubr.bf16.mxu0 0
  %1362 = vmatmul.mubr.bf16.gmra.mxu0 %v752
  %v1363 = vpop.f32.mrf.mxu0
  %v1364 = vadd.f32 0.0, %v1363
  %v1365 = vpop.f32.mrf.mxu0
  %v1366 = vpop.f32.mrf.mxu0
  %v1367 = vadd.f32 0.0, %v1366
  %v1368 = vpop.f32.mrf.mxu0
  %1369 = vdwg.mxu0
  %v1370 = vmax.f32 %v796, %v940
  %v1371 = vmax.f32 %v799, %v943
  %v1372 = vmax.f32 %v804, %v948
  %v1373 = vmax.f32 %v807, %v951
  %v1374 = vmax.f32 %v812, %v956
  %v1375 = vmax.f32 %v815, %v959
  %v1376 = vmax.f32 %v820, %v964
  %v1377 = vmax.f32 %v823, %v967
  %v1378 = vmax.f32 %v828, %v972
  %v1379 = vmax.f32 %v831, %v975
  %v1380 = vmax.f32 %v836, %v980
  %v1381 = vmax.f32 %v839, %v983
  %v1382 = vmax.f32 %v844, %v988
  %v1383 = vmax.f32 %v847, %v991
  %v1384 = vmax.f32 %v852, %v996
  %v1385 = vmax.f32 %v855, %v999
  %v1386 = vmax.f32 %v860, %v1004
  %v1387 = vmax.f32 %v863, %v1007
  %v1388 = vmax.f32 %v868, %v1012
  %v1389 = vmax.f32 %v871, %v1015
  %v1390 = vmax.f32 %v876, %v1020
  %v1391 = vmax.f32 %v879, %v1023
  %v1392 = vmax.f32 %v884, %v1028
  %v1393 = vmax.f32 %v887, %v1031
  %v1394 = vmax.f32 %v892, %v1036
  %v1395 = vmax.f32 %v895, %v1039
  %v1396 = vmax.f32 %v900, %v1044
  %v1397 = vmax.f32 %v903, %v1047
  %v1398 = vmax.f32 %v908, %v1052
  %v1399 = vmax.f32 %v911, %v1055
  %v1400 = vmax.f32 %v916, %v1060
  %v1401 = vmax.f32 %v919, %v1063
  %v1402 = vmax.f32 %v924, %v1068
  %v1403 = vmax.f32 %v927, %v1071
  %v1404 = vmax.f32 %v932, %v1076
  %v1405 = vmax.f32 %v935, %v1079
  %v1406 = vmax.f32 %v1084, %v1228
  %v1407 = vmax.f32 %v1087, %v1231
  %v1408 = vmax.f32 %v1092, %v1236
  %v1409 = vmax.f32 %v1095, %v1239
  %v1410 = vmax.f32 %v1100, %v1244
  %v1411 = vmax.f32 %v1103, %v1247
  %v1412 = vmax.f32 %v1108, %v1252
  %v1413 = vmax.f32 %v1111, %v1255
  %v1414 = vmax.f32 %v1116, %v1260
  %v1415 = vmax.f32 %v1119, %v1263
  %v1416 = vmax.f32 %v1124, %v1268
  %v1417 = vmax.f32 %v1127, %v1271
  %v1418 = vmax.f32 %v1132, %v1276
  %v1419 = vmax.f32 %v1135, %v1279
  %v1420 = vmax.f32 %v1140, %v1284
  %v1421 = vmax.f32 %v1143, %v1287
  %v1422 = vmax.f32 %v1148, %v1292
  %v1423 = vmax.f32 %v1151, %v1295
  %v1424 = vmax.f32 %v1156, %v1300
  %v1425 = vmax.f32 %v1159, %v1303
  %v1426 = vmax.f32 %v1164, %v1308
  %v1427 = vmax.f32 %v1167, %v1311
  %v1428 = vmax.f32 %v1172, %v1316
  %v1429 = vmax.f32 %v1175, %v1319
  %v1430 = vmax.f32 %v1180, %v1324
  %v1431 = vmax.f32 %v1183, %v1327
  %v1432 = vmax.f32 %v1188, %v1332
  %v1433 = vmax.f32 %v1191, %v1335
  %v1434 = vmax.f32 %v1196, %v1340
  %v1435 = vmax.f32 %v1199, %v1343
  %v1436 = vmax.f32 %v1204, %v1348
  %v1437 = vmax.f32 %v1207, %v1351
  %v1438 = vmax.f32 %v1212, %v1356
  %v1439 = vmax.f32 %v1215, %v1359
  %v1440 = vmax.f32 %v1220, %v1364
  %v1441 = vmax.f32 %v1223, %v1367
  %v1442 = vmax.f32 %v1370, %v1406
  %v1443 = vmax.f32 %v1371, %v1407
  %v1444 = vmax.f32 %v1372, %v1408
  %v1445 = vmax.f32 %v1373, %v1409
  %v1446 = vmax.f32 %v1374, %v1410
  %v1447 = vmax.f32 %v1375, %v1411
  %v1448 = vmax.f32 %v1376, %v1412
  %v1449 = vmax.f32 %v1377, %v1413
  %v1450 = vmax.f32 %v1378, %v1414
  %v1451 = vmax.f32 %v1379, %v1415
  %v1452 = vmax.f32 %v1380, %v1416
  %v1453 = vmax.f32 %v1381, %v1417
  %v1454 = vmax.f32 %v1382, %v1418
  %v1455 = vmax.f32 %v1383, %v1419
  %v1456 = vmax.f32 %v1384, %v1420
  %v1457 = vmax.f32 %v1385, %v1421
  %v1458 = vmax.f32 %v1386, %v1422
  %v1459 = vmax.f32 %v1387, %v1423
  %v1460 = vmax.f32 %v1388, %v1424
  %v1461 = vmax.f32 %v1389, %v1425
  %v1462 = vmax.f32 %v1390, %v1426
  %v1463 = vmax.f32 %v1391, %v1427
  %v1464 = vmax.f32 %v1392, %v1428
  %v1465 = vmax.f32 %v1393, %v1429
  %v1466 = vmax.f32 %v1394, %v1430
  %v1467 = vmax.f32 %v1395, %v1431
  %v1468 = vmax.f32 %v1396, %v1432
  %v1469 = vmax.f32 %v1397, %v1433
  %v1470 = vmax.f32 %v1398, %v1434
  %v1471 = vmax.f32 %v1399, %v1435
  %v1472 = vmax.f32 %v1400, %v1436
  %v1473 = vmax.f32 %v1401, %v1437
  %v1474 = vmax.f32 %v1402, %v1438
  %v1475 = vmax.f32 %v1403, %v1439
  %v1476 = vmax.f32 %v1404, %v1440
  %v1477 = vmax.f32 %v1405, %v1441
  %v1478 = vld [vmem:[%s2] sm:$0x1]
  %v1480 = vlaneseq
  %v1481 = vshrl.u32 %v1480, 7
  %v1482 = vsub.s32 0, %v1481
  %v1483 = vrot.slane %v1478, %v1482
  %v1485 = vadd.f32 %v1442, %v1483
  %v1486 = vadd.f32 %v1443, %v1483
  %v1487 = vadd.f32 %v1444, %v1483
  %v1488 = vadd.f32 %v1445, %v1483
  %v1489 = vadd.f32 %v1446, %v1483
  %v1490 = vadd.f32 %v1447, %v1483
  %v1491 = vadd.f32 %v1448, %v1483
  %v1492 = vadd.f32 %v1449, %v1483
  %v1493 = vadd.f32 %v1450, %v1483
  %v1494 = vadd.f32 %v1451, %v1483
  %v1495 = vadd.f32 %v1452, %v1483
  %v1496 = vadd.f32 %v1453, %v1483
  %v1497 = vadd.f32 %v1454, %v1483
  %v1498 = vadd.f32 %v1455, %v1483
  %v1499 = vadd.f32 %v1456, %v1483
  %v1500 = vadd.f32 %v1457, %v1483
  %v1501 = vadd.f32 %v1458, %v1483
  %v1502 = vadd.f32 %v1459, %v1483
  %v1503 = vadd.f32 %v1460, %v1483
  %v1504 = vadd.f32 %v1461, %v1483
  %v1505 = vadd.f32 %v1462, %v1483
  %v1506 = vadd.f32 %v1463, %v1483
  %v1507 = vadd.f32 %v1464, %v1483
  %v1508 = vadd.f32 %v1465, %v1483
  %v1509 = vadd.f32 %v1466, %v1483
  %v1510 = vadd.f32 %v1467, %v1483
  %v1511 = vadd.f32 %v1468, %v1483
  %v1512 = vadd.f32 %v1469, %v1483
  %v1513 = vadd.f32 %v1470, %v1483
  %v1514 = vadd.f32 %v1471, %v1483
  %v1515 = vadd.f32 %v1472, %v1483
  %v1516 = vadd.f32 %v1473, %v1483
  %v1517 = vadd.f32 %v1474, %v1483
  %v1518 = vadd.f32 %v1475, %v1483
  %v1519 = vadd.f32 %v1476, %v1483
  %v1520 = vadd.f32 %v1477, %v1483
  %v1521 = vmax.f32 %v1485, 0.0
  %v1522 = vmax.f32 %v1486, 0.0
  %v1523 = vmax.f32 %v1487, 0.0
  %v1524 = vmax.f32 %v1488, 0.0
  %v1525 = vmax.f32 %v1489, 0.0
  %v1526 = vmax.f32 %v1490, 0.0
  %v1527 = vmax.f32 %v1491, 0.0
  %v1528 = vmax.f32 %v1492, 0.0
  %v1529 = vmax.f32 %v1493, 0.0
  %v1530 = vmax.f32 %v1494, 0.0
  %v1531 = vmax.f32 %v1495, 0.0
  %v1532 = vmax.f32 %v1496, 0.0
  %v1533 = vmax.f32 %v1497, 0.0
  %v1534 = vmax.f32 %v1498, 0.0
  %v1535 = vmax.f32 %v1499, 0.0
  %v1536 = vmax.f32 %v1500, 0.0
  %v1537 = vmax.f32 %v1501, 0.0
  %v1538 = vmax.f32 %v1502, 0.0
  %v1539 = vmax.f32 %v1503, 0.0
  %v1540 = vmax.f32 %v1504, 0.0
  %v1541 = vmax.f32 %v1505, 0.0
  %v1542 = vmax.f32 %v1506, 0.0
  %v1543 = vmax.f32 %v1507, 0.0
  %v1544 = vmax.f32 %v1508, 0.0
  %v1545 = vmax.f32 %v1509, 0.0
  %v1546 = vmax.f32 %v1510, 0.0
  %v1547 = vmax.f32 %v1511, 0.0
  %v1548 = vmax.f32 %v1512, 0.0
  %v1549 = vmax.f32 %v1513, 0.0
  %v1550 = vmax.f32 %v1514, 0.0
  %v1551 = vmax.f32 %v1515, 0.0
  %v1552 = vmax.f32 %v1516, 0.0
  %v1553 = vmax.f32 %v1517, 0.0
  %v1554 = vmax.f32 %v1518, 0.0
  %v1555 = vmax.f32 %v1519, 0.0
  %v1556 = vmax.f32 %v1520, 0.0
  %v1557 = vpack.c.bf16 %v1522, %v1521
  %v1558 = vpack.c.bf16 %v1524, %v1523
  %v1559 = vpack.c.bf16 %v1526, %v1525
  %v1560 = vpack.c.bf16 %v1528, %v1527
  %v1561 = vpack.c.bf16 %v1530, %v1529
  %v1562 = vpack.c.bf16 %v1532, %v1531
  %v1563 = vpack.c.bf16 %v1534, %v1533
  %v1564 = vpack.c.bf16 %v1536, %v1535
  %v1565 = vpack.c.bf16 %v1538, %v1537
  %v1566 = vpack.c.bf16 %v1540, %v1539
  %v1567 = vpack.c.bf16 %v1542, %v1541
  %v1568 = vpack.c.bf16 %v1544, %v1543
  %v1569 = vpack.c.bf16 %v1546, %v1545
  %v1570 = vpack.c.bf16 %v1548, %v1547
  %v1571 = vpack.c.bf16 %v1550, %v1549
  %v1572 = vpack.c.bf16 %v1552, %v1551
  %v1573 = vpack.c.bf16 %v1554, %v1553
  %v1574 = vpack.c.bf16 %v1556, %v1555
  %v1593 = vunpack.c.l.b16 %v1557
  %v1594 = vunpack.c.h.b16 %v1557
  %v1595 = vunpack.c.l.b16 %v1558
  %v1596 = vunpack.c.h.b16 %v1558
  %v1597 = vunpack.c.l.b16 %v1559
  %v1598 = vunpack.c.h.b16 %v1559
  %v1599 = vunpack.c.l.b16 %v1560
  %v1600 = vunpack.c.h.b16 %v1560
  %v1601 = vunpack.c.l.b16 %v1561
  %v1602 = vunpack.c.h.b16 %v1561
  %v1603 = vunpack.c.l.b16 %v1562
  %v1604 = vunpack.c.h.b16 %v1562
  %v1605 = vunpack.c.l.b16 %v1563
  %v1606 = vunpack.c.h.b16 %v1563
  %v1607 = vunpack.c.l.b16 %v1564
  %v1608 = vunpack.c.h.b16 %v1564
  %v1609 = vunpack.c.l.b16 %v1565
  %v1610 = vunpack.c.h.b16 %v1565
  %v1611 = vunpack.c.l.b16 %v1566
  %v1612 = vunpack.c.h.b16 %v1566
  %v1613 = vunpack.c.l.b16 %v1567
  %v1614 = vunpack.c.h.b16 %v1567
  %v1615 = vunpack.c.l.b16 %v1568
  %v1616 = vunpack.c.h.b16 %v1568
  %v1617 = vunpack.c.l.b16 %v1569
  %v1618 = vunpack.c.h.b16 %v1569
  %v1619 = vunpack.c.l.b16 %v1570
  %v1620 = vunpack.c.h.b16 %v1570
  %v1621 = vunpack.c.l.b16 %v1571
  %v1622 = vunpack.c.h.b16 %v1571
  %v1623 = vunpack.c.l.b16 %v1572
  %v1624 = vunpack.c.h.b16 %v1572
  %v1625 = vunpack.c.l.b16 %v1573
  %v1626 = vunpack.c.h.b16 %v1573
  %v1627 = vunpack.c.l.b16 %v1574
  %v1628 = vunpack.c.h.b16 %v1574
  %v1629 = vpack.c.b16 %v1593, %v1593
  %v1630 = vpack.c.b16 %v1594, %v1594
  %v1631 = vpack.c.b16 %v1595, %v1595
  %v1632 = vpack.c.b16 %v1596, %v1596
  %v1633 = vpack.c.b16 %v1597, %v1597
  %v1634 = vpack.c.b16 %v1598, %v1598
  %v1635 = vpack.c.b16 %v1599, %v1599
  %v1636 = vpack.c.b16 %v1600, %v1600
  %v1637 = vpack.c.b16 %v1601, %v1601
  %v1638 = vpack.c.b16 %v1602, %v1602
  %v1639 = vpack.c.b16 %v1603, %v1603
  %v1640 = vpack.c.b16 %v1604, %v1604
  %v1641 = vpack.c.b16 %v1605, %v1605
  %v1642 = vpack.c.b16 %v1606, %v1606
  %v1643 = vpack.c.b16 %v1607, %v1607
  %v1644 = vpack.c.b16 %v1608, %v1608
  %v1645 = vpack.c.b16 %v1609, %v1609
  %v1646 = vpack.c.b16 %v1610, %v1610
  %v1647 = vpack.c.b16 %v1611, %v1611
  %v1648 = vpack.c.b16 %v1612, %v1612
  %v1649 = vpack.c.b16 %v1613, %v1613
  %v1650 = vpack.c.b16 %v1614, %v1614
  %v1651 = vpack.c.b16 %v1615, %v1615
  %v1652 = vpack.c.b16 %v1616, %v1616
  %v1653 = vpack.c.b16 %v1617, %v1617
  %v1654 = vpack.c.b16 %v1618, %v1618
  %v1655 = vpack.c.b16 %v1619, %v1619
  %v1656 = vpack.c.b16 %v1620, %v1620
  %v1657 = vpack.c.b16 %v1621, %v1621
  %v1658 = vpack.c.b16 %v1622, %v1622
  %v1659 = vpack.c.b16 %v1623, %v1623
  %v1660 = vpack.c.b16 %v1624, %v1624
  %v1661 = vpack.c.b16 %v1625, %v1625
  %v1662 = vpack.c.b16 %v1626, %v1626
  %v1663 = vpack.c.b16 %v1627, %v1627
  %v1664 = vpack.c.b16 %v1628, %v1628
  %1701 = vst [vmem:[%s3] sm:$0xf] %v1629
  %1702 = vst [vmem:[%s3 + $0x4] sm:$0xf] %v1630
  %1703 = vst [vmem:[%s3 + $0x8] sm:$0xf] %v1631
  %1704 = vst [vmem:[%s3 + $0xc] sm:$0xf] %v1632
  %1705 = vst [vmem:[%s3 + $0x10] sm:$0xf] %v1633
  %1706 = vst [vmem:[%s3 + $0x14] sm:$0xf] %v1634
  %1707 = vst [vmem:[%s3 + $0x18] sm:$0xf] %v1635
  %1708 = vst [vmem:[%s3 + $0x1c] sm:$0xf] %v1636
  %1709 = vst [vmem:[%s3 + $0x20] sm:$0xf] %v1637
  %1710 = vst [vmem:[%s3 + $0x24] sm:$0xf] %v1638
  %1711 = vst [vmem:[%s3 + $0x28] sm:$0xf] %v1639
  %1712 = vst [vmem:[%s3 + $0x2c] sm:$0xf] %v1640
  %1713 = vst [vmem:[%s3 + $0x30] sm:$0xf] %v1641
  %1714 = vst [vmem:[%s3 + $0x34] sm:$0xf] %v1642
  %1715 = vst [vmem:[%s3 + $0x38] sm:$0xf] %v1643
  %1716 = vst [vmem:[%s3 + $0x3c] sm:$0xf] %v1644
  %1717 = vst [vmem:[%s3 + $0x40] sm:$0xf] %v1645
  %1718 = vst [vmem:[%s3 + $0x44] sm:$0xf] %v1646
  %1719 = vst [vmem:[%s3 + $0x48] sm:$0xf] %v1647
  %1720 = vst [vmem:[%s3 + $0x4c] sm:$0xf] %v1648
  %1721 = vst [vmem:[%s3 + $0x50] sm:$0xf] %v1649
  %1722 = vst [vmem:[%s3 + $0x54] sm:$0xf] %v1650
  %1723 = vst [vmem:[%s3 + $0x58] sm:$0xf] %v1651
  %1724 = vst [vmem:[%s3 + $0x5c] sm:$0xf] %v1652
  %1725 = vst [vmem:[%s3 + $0x60] sm:$0xf] %v1653
  %1726 = vst [vmem:[%s3 + $0x64] sm:$0xf] %v1654
  %1727 = vst [vmem:[%s3 + $0x68] sm:$0xf] %v1655
  %1728 = vst [vmem:[%s3 + $0x6c] sm:$0xf] %v1656
  %1729 = vst [vmem:[%s3 + $0x70] sm:$0xf] %v1657
  %1730 = vst [vmem:[%s3 + $0x74] sm:$0xf] %v1658
  %1731 = vst [vmem:[%s3 + $0x78] sm:$0xf] %v1659
  %1732 = vst [vmem:[%s3 + $0x7c] sm:$0xf] %v1660
  %1733 = vst [vmem:[%s3 + $0x80] sm:$0xf] %v1661
  %1734 = vst [vmem:[%s3 + $0x84] sm:$0xf] %v1662
  %1735 = vst [vmem:[%s3 + $0x88] sm:$0xf] %v1663
  %1736 = vst [vmem:[%s3 + $0x8c] sm:$0xf] %v1664
  // Predicated region
  $region14: #{garment_classifier_forward.3} parent=0 // pred_check
    _
  $region15: #{garment_classifier_forward.3} parent=0 // pred_check_branch
    %1738 = sbr.rel (0) target = $region17
  $region16: #{garment_classifier_forward.3} parent=0 // pred_region
    _
  $region17: #{garment_classifier_forward.3} parent=0 // pred_fallthru
    _
  // Predicated region
  $region18: #{garment_classifier_forward.3} parent=0 // pred_check
    _
  $region19: #{garment_classifier_forward.3} parent=0 // pred_check_branch
    %1740 = sbr.rel (0) target = $region21
  $region20: #{garment_classifier_forward.3} parent=0 // pred_region
    _
  $region21: #{garment_classifier_forward.3} parent=0 // pred_fallthru
    _

// kernel: garment_classifier_forward.4
$region0: #{garment_classifier_forward.4}
  #allocation0 [shape = 'u32[]', space=smem, size = 0x4, offset = 0x4, fixed_abs, tag = 'smem constant byte address 0x4 - core index']
  #allocation1 [shape = 'u32[144,128]{1,0:T(1,128)}', space=vmem, size = 0x12000, scoped, tag = 'internal scratch']
  %s0 = inlined_call_operand.vmem [shape: bf16[4,32,150], index: 0, kind: input, shape index: {}]
  %s1 = inlined_call_operand.vmem [shape: bf16[150,128], index: 1, kind: input, shape index: {}]
  %s2 = inlined_call_operand.vmem [shape: f32[1,128], index: 2, kind: input, shape index: {}]
  %s3 = inlined_call_operand.vmem [shape: bf16[32,128], index: 3, kind: output, shape index: {}]
  %s4 = sld [smem:[#allocation0]]
  $region22: #{garment_classifier_forward.4} parent=0
    _
  %s6 = ssub.s32 1, %s4
  %s7 = scalar_select 0, %s6, %s4
  // Predicated region
  $region2: #{garment_classifier_forward.4} parent=0 // pred_check
    _
  $region3: #{garment_classifier_forward.4} parent=0 // pred_check_branch
    %9 = sbr.rel (0) target = $region5
  $region4: #{garment_classifier_forward.4} parent=0 // pred_region
    _
  $region5: #{garment_classifier_forward.4} parent=0 // pred_fallthru
    _
  // Predicated region
  $region6: #{garment_classifier_forward.4} parent=0 // pred_check
    _
  $region7: #{garment_classifier_forward.4} parent=0 // pred_check_branch
    %11 = sbr.rel (0) target = $region9
  $region8: #{garment_classifier_forward.4} parent=0 // pred_region
    _
  $region9: #{garment_classifier_forward.4} parent=0 // pred_fallthru
    _
  // Predicated region
  $region10: #{garment_classifier_forward.4} parent=0 // pred_check
    _
  $region11: #{garment_classifier_forward.4} parent=0 // pred_check_branch
    %13 = sbr.rel (0) target = $region13
  $region12: #{garment_classifier_forward.4} parent=0 // pred_region
    _
  $region13: #{garment_classifier_forward.4} parent=0 // pred_fallthru
    _
  %v15 = vld [vmem:[%s0] sm:$0xff]
  %v16 = vld [vmem:[%s0 + $0x8] sm:$0xff]
  %v17 = vld [vmem:[%s0 + $0x10] sm:$0xff]
  %v18 = vld [vmem:[%s0 + $0x18] sm:$0xff]
  %s19 = scalar_lea.vmem %s0, 32
  %v20 = vld [vmem:[%s19] sm:$0xff]
  %v21 = vld [vmem:[%s19 + $0x8] sm:$0xff]
  %v22 = vld [vmem:[%s19 + $0x10] sm:$0xff]
  %v23 = vld [vmem:[%s19 + $0x18] sm:$0xff]
  %s24 = scalar_lea.vmem %s0, 64
  %v25 = vld [vmem:[%s24] sm:$0xff]
  %v26 = vld [vmem:[%s24 + $0x8] sm:$0xff]
  %v27 = vld [vmem:[%s24 + $0x10] sm:$0xff]
  %v28 = vld [vmem:[%s24 + $0x18] sm:$0xff]
  %s29 = scalar_lea.vmem %s0, 96
  %v30 = vld [vmem:[%s29] sm:$0xff]
  %v31 = vld [vmem:[%s29 + $0x8] sm:$0xff]
  %v32 = vld [vmem:[%s29 + $0x10] sm:$0xff]
  %v33 = vld [vmem:[%s29 + $0x18] sm:$0xff]
  %v38 = vunpack.c.l.b16 %v15
  %v39 = vunpack.c.h.b16 %v15
  %v40 = vunpack.c.l.b16 %v16
  %v41 = vunpack.c.h.b16 %v16
  %v42 = vunpack.c.l.b16 %v17
  %v43 = vunpack.c.h.b16 %v17
  %v44 = vunpack.c.l.b16 %v18
  %v45 = vunpack.c.h.b16 %v18
  %v46 = vpack.c.b16 %v40, %v38
  %v47 = vpack.c.b16 %v41, %v39
  %v48 = vpack.c.b16 %v44, %v42
  %v49 = vpack.c.b16 %v45, %v43
  %v56 = vunpack.c.l.b16 %v20
  %v57 = vunpack.c.h.b16 %v20
  %v58 = vunpack.c.l.b16 %v21
  %v59 = vunpack.c.h.b16 %v21
  %v60 = vunpack.c.l.b16 %v22
  %v61 = vunpack.c.h.b16 %v22
  %v62 = vunpack.c.l.b16 %v23
  %v63 = vunpack.c.h.b16 %v23
  %v64 = vpack.c.b16 %v58, %v56
  %v65 = vpack.c.b16 %v59, %v57
  %v66 = vpack.c.b16 %v62, %v60
  %v67 = vpack.c.b16 %v63, %v61
  %v74 = vunpack.c.l.b16 %v25
  %v75 = vunpack.c.h.b16 %v25
  %v76 = vunpack.c.l.b16 %v26
  %v77 = vunpack.c.h.b16 %v26
  %v78 = vunpack.c.l.b16 %v27
  %v79 = vunpack.c.h.b16 %v27
  %v80 = vunpack.c.l.b16 %v28
  %v81 = vunpack.c.h.b16 %v28
  %v82 = vpack.c.b16 %v76, %v74
  %v83 = vpack.c.b16 %v77, %v75
  %v84 = vpack.c.b16 %v80, %v78
  %v85 = vpack.c.b16 %v81, %v79
  %v92 = vunpack.c.l.b16 %v30
  %v93 = vunpack.c.h.b16 %v30
  %v94 = vunpack.c.l.b16 %v31
  %v95 = vunpack.c.h.b16 %v31
  %v96 = vunpack.c.l.b16 %v32
  %v97 = vunpack.c.h.b16 %v32
  %v98 = vunpack.c.l.b16 %v33
  %v99 = vunpack.c.h.b16 %v33
  %v100 = vpack.c.b16 %v94, %v92
  %v101 = vpack.c.b16 %v95, %v93
  %v102 = vpack.c.b16 %v98, %v96
  %v103 = vpack.c.b16 %v99, %v97
  %v106 = vld [vmem:[%s1] sm:$0xf]
  %v107 = vld [vmem:[%s1 + $0x4] sm:$0xf]
  %v108 = vld [vmem:[%s1 + $0x8] sm:$0xf]
  %v109 = vld [vmem:[%s1 + $0xc] sm:$0xf]
  %v110 = vld [vmem:[%s1 + $0x10] sm:$0xf]
  %v111 = vld [vmem:[%s1 + $0x14] sm:$0xf]
  %v112 = vld [vmem:[%s1 + $0x18] sm:$0xf]
  %v113 = vld [vmem:[%s1 + $0x1c] sm:$0xf]
  %v114 = vld [vmem:[%s1 + $0x20] sm:$0xf]
  %v115 = vld [vmem:[%s1 + $0x24] sm:$0xf]
  %v116 = vld [vmem:[%s1 + $0x28] sm:$0xf]
  %v117 = vld [vmem:[%s1 + $0x2c] sm:$0xf]
  %v118 = vld [vmem:[%s1 + $0x30] sm:$0xf]
  %v119 = vld [vmem:[%s1 + $0x34] sm:$0xf]
  %v120 = vld [vmem:[%s1 + $0x38] sm:$0xf]
  %v121 = vld [vmem:[%s1 + $0x3c] sm:$0xf]
  %v122 = vld [vmem:[%s1 + $0x40] sm:$0xf]
  %v123 = vld [vmem:[%s1 + $0x44] sm:$0xf]
  %v124 = vld [vmem:[%s1 + $0x48] sm:$0x7]
  %v144 = vunpack.c.l.b16 %v106
  %v145 = vunpack.c.l.b16 %v107
  %v146 = vunpack.c.l.b16 %v108
  %v147 = vunpack.c.l.b16 %v109
  %v148 = vunpack.c.l.b16 %v110
  %v149 = vunpack.c.l.b16 %v111
  %v150 = vunpack.c.l.b16 %v112
  %v151 = vunpack.c.l.b16 %v113
  %v152 = vunpack.c.l.b16 %v114
  %v153 = vunpack.c.l.b16 %v115
  %v154 = vunpack.c.l.b16 %v116
  %v155 = vunpack.c.l.b16 %v117
  %v156 = vunpack.c.l.b16 %v118
  %v157 = vunpack.c.l.b16 %v119
  %v158 = vunpack.c.l.b16 %v120
  %v159 = vunpack.c.l.b16 %v121
  %v160 = vunpack.c.l.b16 %v122
  %v161 = vunpack.c.l.b16 %v123
  %v162 = vunpack.c.l.b16 %v124
  %v163 = vpack.c.b16 %v145, %v144
  %v164 = vpack.c.b16 %v147, %v146
  %v165 = vpack.c.b16 %v149, %v148
  %v166 = vpack.c.b16 %v151, %v150
  %v167 = vpack.c.b16 %v153, %v152
  %v168 = vpack.c.b16 %v155, %v154
  %v169 = vpack.c.b16 %v157, %v156
  %v170 = vpack.c.b16 %v159, %v158
  %v171 = vpack.c.b16 %v161, %v160
  %v172 = vpack.c.b16 %v162, %v162
  %vm182 = vcmask 179200
  %v184 = vsel %vm182, %v47, 0
  %v187 = vsel %vm182, %v49, 0
  %v190 = vsel %vm182, %v65, 0
  %v193 = vsel %vm182, %v67, 0
  %v196 = vsel %vm182, %v83, 0
  %v199 = vsel %vm182, %v85, 0
  %v202 = vsel %vm182, %v101, 0
  %v205 = vsel %vm182, %v103, 0
  %vm207 = vcmask 1042432
  %v209 = vsel %vm207, %v172, 0
  %211 = vmatprep.subr.bf16.mxu0 0
  %212 = vmatpush1.bf16.msra.mxu0 %v170
  %213 = vmatprep.subr.bf16.mxu0 0
  %214 = vmatpush1.bf16.msra.mxu0 %v169
  %215 = vmatprep.subr.bf16.mxu0 0
  %216 = vmatpush1.bf16.msra.mxu0 %v168
  %217 = vmatprep.subr.bf16.mxu0 0
  %218 = vmatpush1.bf16.msra.mxu0 %v167
  %219 = vmatprep.subr.bf16.mxu0 0
  %220 = vmatpush1.bf16.msra.mxu0 %v166
  %221 = vmatprep.subr.bf16.mxu0 0
  %222 = vmatpush1.bf16.msra.mxu0 %v165
  %223 = vmatprep.subr.bf16.mxu0 0
  %224 = vmatpush1.bf16.msra.mxu0 %v164
  %225 = vmatprep.subr.bf16.mxu0 0
  %226 = vmatpush1.bf16.msra.mxu0 %v163
  %227 = vmatprep.subr.bf16.mxu0 0
  %228 = vmatpush2.bf16.msra.mxu0 0
  %229 = vmatprep.subr.bf16.mxu0 0
  %230 = vmatpush2.bf16.msra.mxu0 0
  %231 = vmatprep.subr.bf16.mxu0 0
  %232 = vmatpush2.bf16.msra.mxu0 0
  %233 = vmatprep.subr.bf16.mxu0 0
  %234 = vmatpush2.bf16.msra.mxu0 0
  %235 = vmatprep.subr.bf16.mxu0 0
  %236 = vmatpush2.bf16.msra.mxu0 0
  %237 = vmatprep.subr.bf16.mxu0 0
  %238 = vmatpush2.bf16.msra.mxu0 0
  %239 = vmatprep.subr.bf16.mxu0 0
  %240 = vmatpush2.bf16.msra.mxu0 %v209
  %241 = vmatprep.subr.bf16.mxu0 0
  %242 = vmatpush2.bf16.msra.mxu0 %v171
  %243 = vmatprep.mubr.bf16.mxu0 %v184
  %244 = vmatmul.mubr.bf16.gmra.mxu0 %v46
  %v245 = vpop.f32.mrf.mxu0
  %v246 = vadd.f32 0.0, %v245
  %v247 = vpop.f32.mrf.mxu0
  %v248 = vpop.f32.mrf.mxu0
  %v249 = vadd.f32 0.0, %v248
  %v250 = vpop.f32.mrf.mxu0
  %251 = vmatprep.mubr.bf16.mxu0 %v187
  %252 = vmatmul.mubr.bf16.gmra.mxu0 %v48
  %v253 = vpop.f32.mrf.mxu0
  %v254 = vadd.f32 0.0, %v253
  %v255 = vpop.f32.mrf.mxu0
  %v256 = vpop.f32.mrf.mxu0
  %v257 = vadd.f32 0.0, %v256
  %v258 = vpop.f32.mrf.mxu0
  %259 = vmatprep.mubr.bf16.mxu0 %v190
  %260 = vmatmul.mubr.bf16.gmra.mxu0 %v64
  %v261 = vpop.f32.mrf.mxu0
  %v262 = vadd.f32 0.0, %v261
  %v263 = vpop.f32.mrf.mxu0
  %v264 = vpop.f32.mrf.mxu0
  %v265 = vadd.f32 0.0, %v264
  %v266 = vpop.f32.mrf.mxu0
  %267 = vmatprep.mubr.bf16.mxu0 %v193
  %268 = vmatmul.mubr.bf16.gmra.mxu0 %v66
  %v269 = vpop.f32.mrf.mxu0
  %v270 = vadd.f32 0.0, %v269
  %v271 = vpop.f32.mrf.mxu0
  %v272 = vpop.f32.mrf.mxu0
  %v273 = vadd.f32 0.0, %v272
  %v274 = vpop.f32.mrf.mxu0
  %275 = vmatprep.mubr.bf16.mxu0 %v196
  %276 = vmatmul.mubr.bf16.gmra.mxu0 %v82
  %v277 = vpop.f32.mrf.mxu0
  %v278 = vadd.f32 0.0, %v277
  %v279 = vpop.f32.mrf.mxu0
  %v280 = vpop.f32.mrf.mxu0
  %v281 = vadd.f32 0.0, %v280
  %v282 = vpop.f32.mrf.mxu0
  %283 = vmatprep.mubr.bf16.mxu0 %v199
  %284 = vmatmul.mubr.bf16.gmra.mxu0 %v84
  %v285 = vpop.f32.mrf.mxu0
  %v286 = vadd.f32 0.0, %v285
  %v287 = vpop.f32.mrf.mxu0
  %v288 = vpop.f32.mrf.mxu0
  %v289 = vadd.f32 0.0, %v288
  %v290 = vpop.f32.mrf.mxu0
  %291 = vmatprep.mubr.bf16.mxu0 %v202
  %292 = vmatmul.mubr.bf16.gmra.mxu0 %v100
  %v293 = vpop.f32.mrf.mxu0
  %v294 = vadd.f32 0.0, %v293
  %v295 = vpop.f32.mrf.mxu0
  %v296 = vpop.f32.mrf.mxu0
  %v297 = vadd.f32 0.0, %v296
  %v298 = vpop.f32.mrf.mxu0
  %299 = vmatprep.mubr.bf16.mxu0 %v205
  %300 = vmatmul.mubr.bf16.gmra.mxu0 %v102
  %v301 = vpop.f32.mrf.mxu0
  %v302 = vadd.f32 0.0, %v301
  %v303 = vpop.f32.mrf.mxu0
  %v304 = vpop.f32.mrf.mxu0
  %v305 = vadd.f32 0.0, %v304
  %v306 = vpop.f32.mrf.mxu0
  %307 = vdwg.mxu0
  %v308 = vmax.f32 %v246, %v262
  %v309 = vmax.f32 %v249, %v265
  %v310 = vmax.f32 %v254, %v270
  %v311 = vmax.f32 %v257, %v273
  %v312 = vmax.f32 %v278, %v294
  %v313 = vmax.f32 %v281, %v297
  %v314 = vmax.f32 %v286, %v302
  %v315 = vmax.f32 %v289, %v305
  %v316 = vmax.f32 %v308, %v312
  %v317 = vmax.f32 %v309, %v313
  %v318 = vmax.f32 %v310, %v314
  %v319 = vmax.f32 %v311, %v315
  %v320 = vld [vmem:[%s2] sm:$0x1]
  %v322 = vlaneseq
  %v323 = vshrl.u32 %v322, 7
  %v324 = vsub.s32 0, %v323
  %v325 = vrot.slane %v320, %v324
  %v327 = vadd.f32 %v316, %v325
  %v328 = vadd.f32 %v317, %v325
  %v329 = vadd.f32 %v318, %v325
  %v330 = vadd.f32 %v319, %v325
  %v331 = vmax.f32 %v327, 0.0
  %v332 = vmax.f32 %v328, 0.0
  %v333 = vmax.f32 %v329, 0.0
  %v334 = vmax.f32 %v330, 0.0
  %v335 = vpack.c.bf16 %v332, %v331
  %v336 = vpack.c.bf16 %v334, %v333
  %v339 = vunpack.c.l.b16 %v335
  %v340 = vunpack.c.h.b16 %v335
  %v341 = vunpack.c.l.b16 %v336
  %v342 = vunpack.c.h.b16 %v336
  %v343 = vpack.c.b16 %v339, %v339
  %v344 = vpack.c.b16 %v340, %v340
  %v345 = vpack.c.b16 %v341, %v341
  %v346 = vpack.c.b16 %v342, %v342
  %351 = vst [vmem:[%s3] sm:$0xf] %v343
  %352 = vst [vmem:[%s3 + $0x4] sm:$0xf] %v344
  %353 = vst [vmem:[%s3 + $0x8] sm:$0xf] %v345
  %354 = vst [vmem:[%s3 + $0xc] sm:$0xf] %v346
  // Predicated region
  $region14: #{garment_classifier_forward.4} parent=0 // pred_check
    _
  $region15: #{garment_classifier_forward.4} parent=0 // pred_check_branch
    %356 = sbr.rel (0) target = $region17
  $region16: #{garment_classifier_forward.4} parent=0 // pred_region
    _
  $region17: #{garment_classifier_forward.4} parent=0 // pred_fallthru
    _
  // Predicated region
  $region18: #{garment_classifier_forward.4} parent=0 // pred_check
    _
  $region19: #{garment_classifier_forward.4} parent=0 // pred_check_branch
    %358 = sbr.rel (0) target = $region21
  $region20: #{garment_classifier_forward.4} parent=0 // pred_region
    _
  $region21: #{garment_classifier_forward.4} parent=0 // pred_fallthru
    _

// kernel: garment_classifier_forward.5
$region0: #{garment_classifier_forward.5}
  #allocation0 [shape = 'u32[]', space=smem, size = 0x4, offset = 0x4, fixed_abs, tag = 'smem constant byte address 0x4 - core index']
  #allocation1 [shape = 'u32[144,128]{1,0:T(1,128)}', space=vmem, size = 0x12000, scoped, tag = 'internal scratch']
  %s0 = inlined_call_operand.vmem [shape: bf16[2,256], index: 0, kind: input, shape index: {}]
  %s1 = inlined_call_operand.vmem [shape: bf16[256,120], index: 1, kind: input, shape index: {}]
  %s2 = inlined_call_operand.vmem [shape: f32[1,120], index: 2, kind: input, shape index: {}]
  %s3 = inlined_call_operand.vmem [shape: bf16[120,84], index: 3, kind: input, shape index: {}]
  %s4 = inlined_call_operand.vmem [shape: f32[1,84], index: 4, kind: input, shape index: {}]
  %s5 = inlined_call_operand.vmem [shape: bf16[84,128], index: 5, kind: input, shape index: {}]
  %s6 = inlined_call_operand.vmem [shape: f32[1,128], index: 6, kind: input, shape index: {}]
  %s7 = inlined_call_operand.hbm [shape: f32[2,128], index: 7, kind: output, shape index: {}]
  %s8 = sld [smem:[#allocation0]]
  $region38: #{garment_classifier_forward.5} parent=0
    _
  %s10 = ssub.s32 1, %s8
  %s11 = scalar_select 0, %s10, %s8
  $region1: #{garment_classifier_forward.5} parent=0
    #allocation2 [shape = 'u8[1024]{0}', space=vmem, size = 0x400, scoped, tag = 'output window, operand 0, single buffered']
    #allocation3 [shape = 's32[1]{0}', space=sflag, size = 0x4, scoped, tag = 'scoped memory for garment_classifier_forward.5']
    %12 = vsyncpa [#allocation3], 0
    // Predicated region
    $region2: #{garment_classifier_forward.5} parent=1 // pred_check
      _
    $region3: #{garment_classifier_forward.5} parent=1 // pred_check_branch
      %14 = sbr.rel (0) target = $region5
    $region4: #{garment_classifier_forward.5} parent=1 // pred_region
      _
    $region5: #{garment_classifier_forward.5} parent=1 // pred_fallthru
      _
    // Predicated region
    $region6: #{garment_classifier_forward.5} parent=1 // pred_check
      _
    $region7: #{garment_classifier_forward.5} parent=1 // pred_check_branch
      %16 = sbr.rel (0) target = $region9
    $region8: #{garment_classifier_forward.5} parent=1 // pred_region
      _
    $region9: #{garment_classifier_forward.5} parent=1 // pred_fallthru
      _
    // Predicated region
    $region10: #{garment_classifier_forward.5} parent=1 // pred_check
      _
    $region11: #{garment_classifier_forward.5} parent=1 // pred_check_branch
      %18 = sbr.rel (0) target = $region13
    $region12: #{garment_classifier_forward.5} parent=1 // pred_region
      _
    $region13: #{garment_classifier_forward.5} parent=1 // pred_fallthru
      _
    // Predicated region
    $region14: #{garment_classifier_forward.5} parent=1 // pred_check
      _
    $region15: #{garment_classifier_forward.5} parent=1 // pred_check_branch
      %20 = sbr.rel (0) target = $region17
    $region16: #{garment_classifier_forward.5} parent=1 // pred_region
      _
    $region17: #{garment_classifier_forward.5} parent=1 // pred_fallthru
      _
    // Predicated region
    $region18: #{garment_classifier_forward.5} parent=1 // pred_check
      _
    $region19: #{garment_classifier_forward.5} parent=1 // pred_check_branch
      %22 = sbr.rel (0) target = $region21
    $region20: #{garment_classifier_forward.5} parent=1 // pred_region
      _
    $region21: #{garment_classifier_forward.5} parent=1 // pred_fallthru
      _
    // Predicated region
    $region22: #{garment_classifier_forward.5} parent=1 // pred_check
      _
    $region23: #{garment_classifier_forward.5} parent=1 // pred_check_branch
      %24 = sbr.rel (0) target = $region25
    $region24: #{garment_classifier_forward.5} parent=1 // pred_region
      _
    $region25: #{garment_classifier_forward.5} parent=1 // pred_fallthru
      _
    // Predicated region
    $region26: #{garment_classifier_forward.5} parent=1 // pred_check
      _
    $region27: #{garment_classifier_forward.5} parent=1 // pred_check_branch
      %26 = sbr.rel (0) target = $region29
    $region28: #{garment_classifier_forward.5} parent=1 // pred_region
      _
    $region29: #{garment_classifier_forward.5} parent=1 // pred_fallthru
      _
    %v28 = vld [vmem:[%s0] sm:$0x3]
    %v29 = vld [vmem:[%s1] sm:$0xf]
    %v30 = vld [vmem:[%s1 + $0x4] sm:$0xf]
    %v31 = vld [vmem:[%s1 + $0x8] sm:$0xf]
    %v32 = vld [vmem:[%s1 + $0xc] sm:$0xf]
    %v33 = vld [vmem:[%s1 + $0x10] sm:$0xf]
    %v34 = vld [vmem:[%s1 + $0x14] sm:$0xf]
    %v35 = vld [vmem:[%s1 + $0x18] sm:$0xf]
    %v36 = vld [vmem:[%s1 + $0x1c] sm:$0xf]
    %v37 = vld [vmem:[%s1 + $0x20] sm:$0xf]
    %v38 = vld [vmem:[%s1 + $0x24] sm:$0xf]
    %v39 = vld [vmem:[%s1 + $0x28] sm:$0xf]
    %v40 = vld [vmem:[%s1 + $0x2c] sm:$0xf]
    %v41 = vld [vmem:[%s1 + $0x30] sm:$0xf]
    %v42 = vld [vmem:[%s1 + $0x34] sm:$0xf]
    %v43 = vld [vmem:[%s1 + $0x38] sm:$0xf]
    %v44 = vld [vmem:[%s1 + $0x3c] sm:$0xf]
    %v45 = vld [vmem:[%s1 + $0x40] sm:$0xf]
    %v46 = vld [vmem:[%s1 + $0x44] sm:$0xf]
    %v47 = vld [vmem:[%s1 + $0x48] sm:$0xf]
    %v48 = vld [vmem:[%s1 + $0x4c] sm:$0xf]
    %v49 = vld [vmem:[%s1 + $0x50] sm:$0xf]
    %v50 = vld [vmem:[%s1 + $0x54] sm:$0xf]
    %v51 = vld [vmem:[%s1 + $0x58] sm:$0xf]
    %v52 = vld [vmem:[%s1 + $0x5c] sm:$0xf]
    %v53 = vld [vmem:[%s1 + $0x60] sm:$0xf]
    %v54 = vld [vmem:[%s1 + $0x64] sm:$0xf]
    %v55 = vld [vmem:[%s1 + $0x68] sm:$0xf]
    %v56 = vld [vmem:[%s1 + $0x6c] sm:$0xf]
    %v57 = vld [vmem:[%s1 + $0x70] sm:$0xf]
    %v58 = vld [vmem:[%s1 + $0x74] sm:$0xf]
    %v59 = vld [vmem:[%s1 + $0x78] sm:$0xf]
    %v60 = vld [vmem:[%s1 + $0x7c] sm:$0xf]
    %v61 = vld [vmem:[%s2] sm:$0x1]
    %v63 = vlaneseq
    %v64 = vshrl.u32 %v63, 7
    %v65 = vsub.s32 0, %v64
    %v66 = vrot.slane %v61, %v65
    %v70 = vunpack.c.l.s4 1966171168
    %v71 = vunpack.c.0.s8 %v70
    %v72 = vlaneseq
    %v73 = vshrl.u32 %v72, 7
    %v74 = vsub.s32 %v71, %v73
    %v75 = vrot.slane %v28, %v74
    %v76 = vcombine.high %v75, %v75
    %v78 = vunpack.c.l.s4 1966171168
    %v79 = vunpack.c.0.s8 %v78
    %v80 = vlaneseq
    %v81 = vshrl.u32 %v80, 7
    %v82 = vsub.s32 %v79, %v81
    %v83 = vrot.slane %v75, %v82
    %v85 = vunpack.c.l.s4 1966171168
    %v86 = vunpack.c.0.s8 %v85
    %v87 = vlaneseq
    %v88 = vshrl.u32 %v87, 7
    %v89 = vsub.s32 %v86, %v88
    %v90 = vrot.slane %v76, %v89
    %v125 = vunpack.c.l.b16 %v29
    %v126 = vunpack.c.l.b16 %v30
    %v127 = vunpack.c.l.b16 %v31
    %v128 = vunpack.c.l.b16 %v32
    %v129 = vunpack.c.l.b16 %v33
    %v130 = vunpack.c.l.b16 %v34
    %v131 = vunpack.c.l.b16 %v35
    %v132 = vunpack.c.l.b16 %v36
    %v133 = vunpack.c.l.b16 %v37
    %v134 = vunpack.c.l.b16 %v38
    %v135 = vunpack.c.l.b16 %v39
    %v136 = vunpack.c.l.b16 %v40
    %v137 = vunpack.c.l.b16 %v41
    %v138 = vunpack.c.l.b16 %v42
    %v139 = vunpack.c.l.b16 %v43
    %v140 = vunpack.c.l.b16 %v44
    %v141 = vunpack.c.l.b16 %v45
    %v142 = vunpack.c.l.b16 %v46
    %v143 = vunpack.c.l.b16 %v47
    %v144 = vunpack.c.l.b16 %v48
    %v145 = vunpack.c.l.b16 %v49
    %v146 = vunpack.c.l.b16 %v50
    %v147 = vunpack.c.l.b16 %v51
    %v148 = vunpack.c.l.b16 %v52
    %v149 = vunpack.c.l.b16 %v53
    %v150 = vunpack.c.l.b16 %v54
    %v151 = vunpack.c.l.b16 %v55
    %v152 = vunpack.c.l.b16 %v56
    %v153 = vunpack.c.l.b16 %v57
    %v154 = vunpack.c.l.b16 %v58
    %v155 = vunpack.c.l.b16 %v59
    %v156 = vunpack.c.l.b16 %v60
    %v157 = vpack.c.b16 %v126, %v125
    %v158 = vpack.c.b16 %v128, %v127
    %v159 = vpack.c.b16 %v130, %v129
    %v160 = vpack.c.b16 %v132, %v131
    %v161 = vpack.c.b16 %v134, %v133
    %v162 = vpack.c.b16 %v136, %v135
    %v163 = vpack.c.b16 %v138, %v137
    %v164 = vpack.c.b16 %v140, %v139
    %v165 = vpack.c.b16 %v142, %v141
    %v166 = vpack.c.b16 %v144, %v143
    %v167 = vpack.c.b16 %v146, %v145
    %v168 = vpack.c.b16 %v148, %v147
    %v169 = vpack.c.b16 %v150, %v149
    %v170 = vpack.c.b16 %v152, %v151
    %v171 = vpack.c.b16 %v154, %v153
    %v172 = vpack.c.b16 %v156, %v155
    %189 = vmatprep.subr.bf16.mxu0 0
    %190 = vmatpush1.bf16.msra.mxu0 %v164
    %191 = vmatprep.subr.bf16.mxu0 0
    %192 = vmatpush1.bf16.msra.mxu0 %v163
    %193 = vmatprep.subr.bf16.mxu0 0
    %194 = vmatpush1.bf16.msra.mxu0 %v162
    %195 = vmatprep.subr.bf16.mxu0 0
    %196 = vmatpush1.bf16.msra.mxu0 %v161
    %197 = vmatprep.subr.bf16.mxu0 0
    %198 = vmatpush1.bf16.msra.mxu0 %v160
    %199 = vmatprep.subr.bf16.mxu0 0
    %200 = vmatpush1.bf16.msra.mxu0 %v159
    %201 = vmatprep.subr.bf16.mxu0 0
    %202 = vmatpush1.bf16.msra.mxu0 %v158
    %203 = vmatprep.subr.bf16.mxu0 0
    %204 = vmatpush1.bf16.msra.mxu0 %v157
    %205 = vmatprep.subr.bf16.mxu0 0
    %206 = vmatpush2.bf16.msra.mxu0 %v172
    %207 = vmatprep.subr.bf16.mxu0 0
    %208 = vmatpush2.bf16.msra.mxu0 %v171
    %209 = vmatprep.subr.bf16.mxu0 0
    %210 = vmatpush2.bf16.msra.mxu0 %v170
    %211 = vmatprep.subr.bf16.mxu0 0
    %212 = vmatpush2.bf16.msra.mxu0 %v169
    %213 = vmatprep.subr.bf16.mxu0 0
    %214 = vmatpush2.bf16.msra.mxu0 %v168
    %215 = vmatprep.subr.bf16.mxu0 0
    %216 = vmatpush2.bf16.msra.mxu0 %v167
    %217 = vmatprep.subr.bf16.mxu0 0
    %218 = vmatpush2.bf16.msra.mxu0 %v166
    %219 = vmatprep.subr.bf16.mxu0 0
    %220 = vmatpush2.bf16.msra.mxu0 %v165
    %221 = vmatprep.mubr.bf16.mxu0 %v90
    %222 = vmatmul.mubr.bf16.gmra.mxu0 %v83
    %v223 = vpop.f32.mrf.mxu0
    %v224 = vadd.f32 %v66, %v223
    %v225 = vpop.f32.mrf.mxu0
    %v226 = vpop.f32.mrf.mxu0
    %v227 = vpop.f32.mrf.mxu0
    %228 = vdwg.mxu0
    %v229 = vmax.f32 %v224, 0.0
    %v230 = vpack.c.bf16 %v229, %v229
    %v231 = vld [vmem:[%s3] sm:$0xf]
    %v232 = vld [vmem:[%s3 + $0x4] sm:$0xf]
    %v233 = vld [vmem:[%s3 + $0x8] sm:$0xf]
    %v234 = vld [vmem:[%s3 + $0xc] sm:$0xf]
    %v235 = vld [vmem:[%s3 + $0x10] sm:$0xf]
    %v236 = vld [vmem:[%s3 + $0x14] sm:$0xf]
    %v237 = vld [vmem:[%s3 + $0x18] sm:$0xf]
    %v238 = vld [vmem:[%s3 + $0x1c] sm:$0xf]
    %v239 = vld [vmem:[%s3 + $0x20] sm:$0xf]
    %v240 = vld [vmem:[%s3 + $0x24] sm:$0xf]
    %v241 = vld [vmem:[%s3 + $0x28] sm:$0xf]
    %v242 = vld [vmem:[%s3 + $0x2c] sm:$0xf]
    %v243 = vld [vmem:[%s3 + $0x30] sm:$0xf]
    %v244 = vld [vmem:[%s3 + $0x34] sm:$0xf]
    %v245 = vld [vmem:[%s3 + $0x38] sm:$0xf]
    %v246 = vld [vmem:[%s4] sm:$0x1]
    %v248 = vlaneseq
    %v249 = vshrl.u32 %v248, 7
    %v250 = vsub.s32 0, %v249
    %v251 = vrot.slane %v246, %v250
    %v268 = vunpack.c.l.b16 %v231
    %v269 = vunpack.c.l.b16 %v232
    %v270 = vunpack.c.l.b16 %v233
    %v271 = vunpack.c.l.b16 %v234
    %v272 = vunpack.c.l.b16 %v235
    %v273 = vunpack.c.l.b16 %v236
    %v274 = vunpack.c.l.b16 %v237
    %v275 = vunpack.c.l.b16 %v238
    %v276 = vunpack.c.l.b16 %v239
    %v277 = vunpack.c.l.b16 %v240
    %v278 = vunpack.c.l.b16 %v241
    %v279 = vunpack.c.l.b16 %v242
    %v280 = vunpack.c.l.b16 %v243
    %v281 = vunpack.c.l.b16 %v244
    %v282 = vunpack.c.l.b16 %v245
    %v283 = vpack.c.b16 %v269, %v268
    %v284 = vpack.c.b16 %v271, %v270
    %v285 = vpack.c.b16 %v273, %v272
    %v286 = vpack.c.b16 %v275, %v274
    %v287 = vpack.c.b16 %v277, %v276
    %v288 = vpack.c.b16 %v279, %v278
    %v289 = vpack.c.b16 %v281, %v280
    %v290 = vpack.c.b16 %v282, %v282
    %vm298 = vcmask 982016
    %v300 = vsel %vm298, %v230, 0
    %vm302 = vcmask 1043456
    %v304 = vsel %vm302, %v290, 0
    %306 = vmatprep.subr.bf16.mxu0 0
    %307 = vmatpush1.bf16.msra.mxu0 %v304
    %308 = vmatprep.subr.bf16.mxu0 0
    %309 = vmatpush1.bf16.msra.mxu0 %v289
    %310 = vmatprep.subr.bf16.mxu0 0
    %311 = vmatpush1.bf16.msra.mxu0 %v288
    %312 = vmatprep.subr.bf16.mxu0 0
    %313 = vmatpush1.bf16.msra.mxu0 %v287
    %314 = vmatprep.subr.bf16.mxu0 0
    %315 = vmatpush1.bf16.msra.mxu0 %v286
    %316 = vmatprep.subr.bf16.mxu0 0
    %317 = vmatpush1.bf16.msra.mxu0 %v285
    %318 = vmatprep.subr.bf16.mxu0 0
    %319 = vmatpush1.bf16.msra.mxu0 %v284
    %320 = vmatprep.subr.bf16.mxu0 0
    %321 = vmatpush1.bf16.msra.mxu0 %v283
    %322 = vmatprep.subr.bf16.mxu0 0
    %323 = vmatpush2.bf16.msra.mxu0 0
    %324 = vmatprep.subr.bf16.mxu0 0
    %325 = vmatpush2.bf16.msra.mxu0 0
    %326 = vmatprep.subr.bf16.mxu0 0
    %327 = vmatpush2.bf16.msra.mxu0 0
    %328 = vmatprep.subr.bf16.mxu0 0
    %329 = vmatpush2.bf16.msra.mxu0 0
    %330 = vmatprep.subr.bf16.mxu0 0
    %331 = vmatpush2.bf16.msra.mxu0 0
    %332 = vmatprep.subr.bf16.mxu0 0
    %333 = vmatpush2.bf16.msra.mxu0 0
    %334 = vmatprep.subr.bf16.mxu0 0
    %335 = vmatpush2.bf16.msra.mxu0 0
    %336 = vmatprep.subr.bf16.mxu0 0
    %337 = vmatpush2.bf16.msra.mxu0 0
    %338 = vmatprep.mubr.bf16.mxu0 0
    %339 = vmatmul.mubr.bf16.gmra.mxu0 %v300
    %v340 = vpop.f32.mrf.mxu0
    %v341 = vadd.f32 %v251, %v340
    %v342 = vpop.f32.mrf.mxu0
    %v343 = vpop.f32.mrf.mxu0
    %v344 = vpop.f32.mrf.mxu0
    %345 = vdwg.mxu0
    %v346 = vmax.f32 %v341, 0.0
    %v347 = vpack.c.bf16 %v346, %v346
    %v348 = vld [vmem:[%s5] sm:$0xf]
    %v349 = vld [vmem:[%s5 + $0x4] sm:$0xf]
    %v350 = vld [vmem:[%s5 + $0x8] sm:$0xf]
    %v351 = vld [vmem:[%s5 + $0xc] sm:$0xf]
    %v352 = vld [vmem:[%s5 + $0x10] sm:$0xf]
    %v353 = vld [vmem:[%s5 + $0x14] sm:$0xf]
    %v354 = vld [vmem:[%s5 + $0x18] sm:$0xf]
    %v355 = vld [vmem:[%s5 + $0x1c] sm:$0xf]
    %v356 = vld [vmem:[%s5 + $0x20] sm:$0xf]
    %v357 = vld [vmem:[%s5 + $0x24] sm:$0xf]
    %v358 = vld [vmem:[%s5 + $0x28] sm:$0x3]
    %v359 = vld [vmem:[%s6] sm:$0x1]
    %v361 = vlaneseq
    %v362 = vshrl.u32 %v361, 7
    %v363 = vsub.s32 0, %v362
    %v364 = vrot.slane %v359, %v363
    %v377 = vunpack.c.l.b16 %v348
    %v378 = vunpack.c.l.b16 %v349
    %v379 = vunpack.c.l.b16 %v350
    %v380 = vunpack.c.l.b16 %v351
    %v381 = vunpack.c.l.b16 %v352
    %v382 = vunpack.c.l.b16 %v353
    %v383 = vunpack.c.l.b16 %v354
    %v384 = vunpack.c.l.b16 %v355
    %v385 = vunpack.c.l.b16 %v356
    %v386 = vunpack.c.l.b16 %v357
    %v387 = vunpack.c.l.b16 %v358
    %v388 = vpack.c.b16 %v378, %v377
    %v389 = vpack.c.b16 %v380, %v379
    %v390 = vpack.c.b16 %v382, %v381
    %v391 = vpack.c.b16 %v384, %v383
    %v392 = vpack.c.b16 %v386, %v385
    %v393 = vpack.c.b16 %v387, %v387
    %vm399 = vcmask 687104
    %v401 = vsel %vm399, %v347, 0
    %vm403 = vcmask 1041408
    %v405 = vsel %vm403, %v393, 0
    %407 = vmatprep.subr.bf16.mxu0 0
    %408 = vmatpush1.bf16.msra.mxu0 0
    %409 = vmatprep.subr.bf16.mxu0 0
    %410 = vmatpush1.bf16.msra.mxu0 0
    %411 = vmatprep.subr.bf16.mxu0 0
    %412 = vmatpush1.bf16.msra.mxu0 %v405
    %413 = vmatprep.subr.bf16.mxu0 0
    %414 = vmatpush1.bf16.msra.mxu0 %v392
    %415 = vmatprep.subr.bf16.mxu0 0
    %416 = vmatpush1.bf16.msra.mxu0 %v391
    %417 = vmatprep.subr.bf16.mxu0 0
    %418 = vmatpush1.bf16.msra.mxu0 %v390
    %419 = vmatprep.subr.bf16.mxu0 0
    %420 = vmatpush1.bf16.msra.mxu0 %v389
    %421 = vmatprep.subr.bf16.mxu0 0
    %422 = vmatpush1.bf16.msra.mxu0 %v388
    %423 = vmatprep.subr.bf16.mxu0 0
    %424 = vmatpush2.bf16.msra.mxu0 0
    %425 = vmatprep.subr.bf16.mxu0 0
    %426 = vmatpush2.bf16.msra.mxu0 0
    %427 = vmatprep.subr.bf16.mxu0 0
    %428 = vmatpush2.bf16.msra.mxu0 0
    %429 = vmatprep.subr.bf16.mxu0 0
    %430 = vmatpush2.bf16.msra.mxu0 0
    %431 = vmatprep.subr.bf16.mxu0 0
    %432 = vmatpush2.bf16.msra.mxu0 0
    %433 = vmatprep.subr.bf16.mxu0 0
    %434 = vmatpush2.bf16.msra.mxu0 0
    %435 = vmatprep.subr.bf16.mxu0 0
    %436 = vmatpush2.bf16.msra.mxu0 0
    %437 = vmatprep.subr.bf16.mxu0 0
    %438 = vmatpush2.bf16.msra.mxu0 0
    %439 = vmatprep.mubr.bf16.mxu0 0
    %440 = vmatmul.mubr.bf16.gmra.mxu0 %v401
    %v441 = vpop.f32.mrf.mxu0
    %v442 = vadd.f32 %v364, %v441
    %v443 = vpop.f32.mrf.mxu0
    %v444 = vpop.f32.mrf.mxu0
    %v445 = vpop.f32.mrf.mxu0
    %446 = vdwg.mxu0
    %447 = vst [vmem:[#allocation2] sm:$0x3] %v442
    // Predicated region
    $region30: #{garment_classifier_forward.5} parent=1 // pred_check
      _
    $region31: #{garment_classifier_forward.5} parent=1 // pred_check_branch
      %449 = sbr.rel (0) target = $region33
    $region32: #{garment_classifier_forward.5} parent=1 // pred_region
      %s451 = ssub.s32 32, 32
      %452 = vsyncadd [#allocation3], %s451
      %s454 = sshll.u32 [#allocation2], 4
      %s455 = int_to_ptr.vmem [resolvable:$true] %s454
      %457 = dma.vmem_to_hbm [thread:$0]  %s455, 32, %s7, [#allocation3]
    $region33: #{garment_classifier_forward.5} parent=1 // pred_fallthru
      _
    // Predicated region
    $region34: #{garment_classifier_forward.5} parent=1 // pred_check
      _
    $region35: #{garment_classifier_forward.5} parent=1 // pred_check_branch
      %459 = sbr.rel (0) target = $region37
    $region36: #{garment_classifier_forward.5} parent=1 // pred_region
      %460 = dma.done [#allocation3], 32
    $region37: #{garment_classifier_forward.5} parent=1 // pred_fallthru
      _
    %461 = vsyncpa [#allocation3], 1

</llo_original>
